<compile_context>
chip_gen: v6e
topology: v6e:2x2x1
jax: 0.10.0
libtpu: 0.0.40
codegen_flags: <defaults>
</compile_context>

<pallas_src>
import functools

import jax
import jax.numpy as jnp
from jax import lax
from jax.experimental import pallas as pl
from jax.experimental.pallas import tpu as pltpu


def _layer_norm(x, gamma, beta, eps=1e-5):
    mu = jnp.mean(x, axis=-1, keepdims=True)
    var = jnp.mean((x - mu) ** 2, axis=-1, keepdims=True)
    return (x - mu) * lax.rsqrt(var + eps) * gamma + beta


def sparse_transformer_kernel(
    x_ref, mem_ref, idx_ref,
    wq_ref, bq_ref, wk_ref, bk_ref, wv_ref, bv_ref,
    wl_ref, bl_ref, g1_ref, b1_ref,
    we_ref, be_ref, ws_ref, bs_ref, g2_ref, b2_ref,
    out_ref,
    *, num_heads, compute_dtype, approx_reciprocal):
    f32 = jnp.float32
    cdt = compute_dtype

    x = x_ref[...].astype(f32)        # (R, C)    R  = batch_tile * N
    mem = mem_ref[...].astype(f32)    # (RM, C)   RM = batch_tile * M
    idx = idx_ref[...]                # (R, K) int32, rebased to the folded memory
                                      #        rows of this tile; masked slots == RM

    R, C = x.shape
    RM = mem.shape[0]
    K = idx.shape[1]
    H = num_heads
    c = C // H
    scale = 1.0 / (c ** 0.5)

    # ---- projections (row-folded over the batch tile; bf16 operands, f32 acc) ----
    xc = x.astype(cdt)
    mc = mem.astype(cdt)
    # 1/sqrt(c) folded into q: one (R, C) multiply replaces H x (R, RM) score scaling.
    q = (jnp.dot(xc, wq_ref[...], preferred_element_type=f32) + bq_ref[...]) * scale
    k = jnp.dot(mc, wk_ref[...], preferred_element_type=f32) + bk_ref[...]   # (RM, C)
    v = jnp.dot(mc, wv_ref[...], preferred_element_type=f32) + bv_ref[...]   # (RM, C)
    qc = q.astype(cdt)
    kc = k.astype(cdt)
    vc = v.astype(cdt)

    # ---- neighbour-count matrix (exact knn_gather semantics, incl. duplicates) ----
    # count[r, m] = #{k : idx[r, k] == m}; masked slots carry the sentinel RM and
    # never match, so the mask is already folded in.  Block-diagonal over the folded
    # batch tile, so cross-batch attention terms vanish automatically.
    iota_m = lax.broadcasted_iota(jnp.int32, (R, RM), 1)
    wcnt = jnp.zeros((R, RM), jnp.int32)
    for kk in range(K):  # static unroll; int32 VPU compares on lane-dense (R, RM)
        wcnt = wcnt + (idx[:, kk:kk + 1] == iota_m).astype(jnp.int32)
    wf = wcnt.astype(f32)
    # Additive log-count bias: exp(s + log(count)) == count * exp(s).  -1e30 (not
    # -inf) keeps degenerate all-masked rows finite; masked columns still underflow
    # to exactly 0 after exp in f32.
    logw = jnp.where(wcnt > 0, jnp.log(wf), -1e30)             # (R, RM) f32

    # ---- per-head streaming: score -> +log-count -> softmax -> P @ V (MXU) -------
    # Only one (R, RM) score tensor is live at a time (vs. ~3*H*R*RM when stacking).
    dn = (((1,), (1,)), ((), ()))  # contract head_dim, no batch dims
    ctx = []
    for h in range(H):
        lo, hi = h * c, (h + 1) * c
        s = lax.dot_general(qc[:, lo:hi], kc[:, lo:hi], dn,
                            preferred_element_type=f32) + logw  # (R, RM)
        mx = jnp.max(s, axis=-1, keepdims=True)                 # (R, 1)
        p = jnp.exp(s - mx)                                     # masked cols -> 0
        denom = jnp.sum(p, axis=-1, keepdims=True)              # >= 1 always
        inv = pl.reciprocal(denom, approx=approx_reciprocal)    # EUP slot on bf16 path
        ctx.append(jnp.dot(p.astype(cdt), vc[:, lo:hi],
                           preferred_element_type=f32) * inv)   # (R, c)
    hid = jnp.concatenate(ctx, axis=-1)                         # (R, C) f32

    # ---- output linear + residual + LayerNorm ----
    hid = jnp.dot(hid.astype(cdt), wl_ref[...], preferred_element_type=f32) + bl_ref[...]
    y = _layer_norm(hid + x, g1_ref[...], b1_ref[...])

    # ---- AttentionOutput: expand -> ReLU -> squeeze -> residual + LayerNorm ----
    h2 = jnp.dot(y.astype(cdt), we_ref[...], preferred_element_type=f32) + be_ref[...]
    h2 = jnp.maximum(h2, 0.0)
    h2 = jnp.dot(h2.astype(cdt), ws_ref[...], preferred_element_type=f32) + bs_ref[...]
    out = _layer_norm(y + h2, g2_ref[...], b2_ref[...])

    out_ref[...] = out.astype(out_ref.dtype)


def _pick_batch_tile(B, N, M, target_rows=512):
    """Pick a batch tile: >=2 grid steps when possible (v7x megacore), ~target_rows
    folded rows per step, and (8,128)-rule-compatible blocks when the grid > 1."""
    cands = [bt for bt in range(1, B + 1) if B % bt == 0]
    valid = [bt for bt in cands
             if bt == B or ((bt * N) % 8 == 0 and (bt * M) % 8 == 0)]
    if not valid:
        return B
    multi = [bt for bt in valid if B // bt >= 2]
    pool = multi if multi else valid
    return min(pool, key=lambda bt: abs(bt * N - target_rows))


def _default_vmem_limit():
    # ~75% of physical VMEM, capped at 100 MiB: ~96 MiB on v5e/v6e (128 MiB),
    # ~48 MiB on v7x (64 MiB).  Falls back to a v7x-safe 48 MiB.
    try:
        cap = pltpu.get_tpu_info().vmem_capacity_bytes
        return min(int(cap * 3 // 4), 100 * 1024 * 1024)
    except Exception:
        return 48 * 1024 * 1024


def sparse_transformer_layer(x, mem, indices, mask, params, num_heads,
                             *, batch_tile=None, use_bf16=True,
                             vmem_limit_bytes=None):
    B, N, C = x.shape
    M = mem.shape[1]
    K = indices.shape[2]
    if batch_tile is None:
        batch_tile = _pick_batch_tile(B, N, M)
    assert B % batch_tile == 0, "batch_tile must divide B"
    BT = batch_tile
    G = B // BT                 # grid length (one step per batch tile)
    R = BT * N                  # query rows per grid step
    RM = BT * M                 # memory rows per grid step
    if G > 1:
        assert R % 8 == 0 and RM % 8 == 0, (
            "(8,128) block rule: BT*N and BT*M must be multiples of 8 when G > 1")
    cdt = jnp.bfloat16 if use_bf16 else jnp.float32
    if vmem_limit_bytes is None:
        vmem_limit_bytes = _default_vmem_limit()

    # Flatten to row-major 2-D; rebase indices onto the folded memory rows of each
    # tile and fold the binary attention_mask into them (masked slot -> sentinel RM,
    # which matches nothing).  Indices are assumed to lie in [0, M).
    x2 = x.reshape(B * N, C)
    mem2 = mem.reshape(B * M, C)
    local_off = (jnp.arange(B, dtype=jnp.int32) % BT) * M
    idx_local = indices.astype(jnp.int32) + local_off[:, None, None]
    idx2 = jnp.where(mask > 0, idx_local, RM).astype(jnp.int32).reshape(B * N, K)

    # MXU-facing weights in compute dtype (biases / LN params stay f32); weights are
    # stored pre-transposed in (in, out) layout so no per-call .T is materialized.
    wq = params["wq"].astype(cdt); wk = params["wk"].astype(cdt)
    wv = params["wv"].astype(cdt); wl = params["wl"].astype(cdt)
    we = params["we"].astype(cdt); ws = params["ws"].astype(cdt)

    rows = lambda r, d: pl.BlockSpec((r, d), lambda i: (i, 0))
    const = lambda shape: pl.BlockSpec(shape, lambda i: (0, 0))

    kernel = functools.partial(sparse_transformer_kernel,
                               num_heads=num_heads, compute_dtype=cdt,
                               approx_reciprocal=use_bf16)

    out2 = pl.pallas_call(
        kernel,
        out_shape=jax.ShapeDtypeStruct((B * N, C), jnp.float32),
        grid=(G,),
        in_specs=[
            rows(R, C),             # input_states  (row-folded)
            rows(RM, C),            # memory_states (row-folded)
            rows(R, K),             # indices (tile-local rows; mask folded in)
            const((C, C)), const((1, C)),           # Wq, bq
            const((C, C)), const((1, C)),           # Wk, bk
            const((C, C)), const((1, C)),           # Wv, bv
            const((C, C)), const((1, C)),           # Wlinear, blinear
            const((1, C)), const((1, C)),           # LN1 gamma, beta
            const((C, 2 * C)), const((1, 2 * C)),   # Wexpand, bexpand
            const((2 * C, C)), const((1, C)),       # Wsqueeze, bsqueeze
            const((1, C)), const((1, C)),           # LN2 gamma, beta
        ],
        out_specs=rows(R, C),
        compiler_params=pltpu.CompilerParams(
            dimension_semantics=("parallel",),      # batch tiles are independent
            vmem_limit_bytes=vmem_limit_bytes),
    )(x2, mem2, idx2,
      wq, params["bq"], wk, params["bk"], wv, params["bv"],
      wl, params["bl"], params["g1"], params["b1"],
      we, params["be"], ws, params["bs"], params["g2"], params["b2"])

    return out2.reshape(B, N, C)


def reference(x, mem, indices, mask, p, num_heads):
    """Pure-JAX reproduction of the PyTorch forward (weights in (in, out) layout)."""
    lin = lambda t, w, b: t @ w + b[0]
    q = lin(x, p["wq"], p["bq"])
    k_mem = lin(mem, p["wk"], p["bk"])
    v_mem = lin(mem, p["wv"], p["bv"])
    gather = jax.vmap(lambda t, i: t[i])   # (M,C),(N,K) -> (N,K,C)
    k = gather(k_mem, indices)
    v = gather(v_mem, indices)
    B, N, C = x.shape
    K = indices.shape[2]
    H = num_heads
    c = C // H
    qh = q.reshape(B, N, H, c).transpose(0, 2, 1, 3)
    kh = k.reshape(B, N, K, H, c).transpose(0, 3, 1, 2, 4)
    vh = v.reshape(B, N, K, H, c).transpose(0, 3, 1, 2, 4)
    s = jnp.einsum("bhnc,bhnkc->bhnk", qh, kh) / (c ** 0.5)
    s = s - 1000000.0 * (1.0 - mask[:, None])
    a = jax.nn.softmax(s, axis=-1)
    hid = jnp.einsum("bhnk,bhnkc->bhnc", a, vh)
    hid = hid.transpose(0, 2, 1, 3).reshape(B, N, C)
    hid = lin(hid, p["wl"], p["bl"])

    def ln(t, g_, b_):
        mu = t.mean(-1, keepdims=True)
        var = ((t - mu) ** 2).mean(-1, keepdims=True)
        return (t - mu) / jnp.sqrt(var + 1e-5) * g_[0] + b_[0]

    y = ln(hid + x, p["g1"], p["b1"])
    h2 = jnp.maximum(lin(y, p["we"], p["be"]), 0.0)
    h2 = lin(h2, p["ws"], p["bs"])
    return ln(y + h2, p["g2"], p["b2"])


def make_params(key, d_model):
    C = d_model
    ks = jax.random.split(key, 12)
    s = 0.1
    # Linear weights stored pre-transposed in (in, out) layout.
    return {
        "wq": s * jax.random.normal(ks[0], (C, C), jnp.float32),
        "bq": s * jax.random.normal(ks[1], (1, C), jnp.float32),
        "wk": s * jax.random.normal(ks[2], (C, C), jnp.float32),
        "bk": s * jax.random.normal(ks[3], (1, C), jnp.float32),
        "wv": s * jax.random.normal(ks[4], (C, C), jnp.float32),
        "bv": s * jax.random.normal(ks[5], (1, C), jnp.float32),
        "wl": s * jax.random.normal(ks[6], (C, C), jnp.float32),
        "bl": s * jax.random.normal(ks[7], (1, C), jnp.float32),
        "g1": jnp.ones((1, C), jnp.float32),
        "b1": jnp.zeros((1, C), jnp.float32),
        # AttentionOutput: Linear(C, 2C) -> ReLU -> Linear(2C, C) -> LN
        "we": s * jax.random.normal(ks[8], (C, 2 * C), jnp.float32),
        "be": s * jax.random.normal(ks[9], (1, 2 * C), jnp.float32),
        "ws": s * jax.random.normal(ks[10], (2 * C, C), jnp.float32),
        "bs": s * jax.random.normal(ks[11], (1, C), jnp.float32),
        "g2": jnp.ones((1, C), jnp.float32),
        "b2": jnp.zeros((1, C), jnp.float32),
    }


if __name__ == "__main__":
    B, N, M, K = 2, 16, 16, 8
    d_model, num_heads = 32, 4

    root = jax.random.PRNGKey(0)
    k_x, k_mem, k_idx, k_mask, k_par = jax.random.split(root, 5)

    x = jax.random.normal(k_x, (B, N, d_model), jnp.float32)
    mem = jax.random.normal(k_mem, (B, M, d_model), jnp.float32)
    indices = jax.random.randint(k_idx, (B, N, K), 0, M, dtype=jnp.int32)
    mask = (jax.random.uniform(k_mask, (B, N, K)) > 0.3).astype(jnp.float32)
    mask = mask.at[..., 0].set(1.0)  # keep at least one unmasked neighbor

    params = make_params(k_par, d_model)
    ref = reference(x, mem, indices, mask, params, num_heads)

    # bf16 MXU operands, f32 accumulation; auto batch_tile gives a 2-step grid.
    out = sparse_transformer_layer(x, mem, indices, mask, params, num_heads,
                                   use_bf16=True)
    out = jax.block_until_ready(out)
    assert out.shape == (B, N, d_model)
    assert jnp.allclose(out, ref, atol=5e-2, rtol=5e-2), (
        float(jnp.max(jnp.abs(out - ref))))

    # f32 path with exact reciprocal: tight check of the log-count softmax rewrite.
    out_f32 = sparse_transformer_layer(x, mem, indices, mask, params, num_heads,
                                       use_bf16=False)
    out_f32 = jax.block_until_ready(out_f32)
    assert jnp.allclose(out_f32, ref, atol=5e-3, rtol=5e-3), (
        float(jnp.max(jnp.abs(out_f32 - ref))))

    # Single-tile grid (old v2 layout) still works and agrees.
    out_g1 = sparse_transformer_layer(x, mem, indices, mask, params, num_heads,
                                      batch_tile=B, use_bf16=True)
    out_g1 = jax.block_until_ready(out_g1)
    assert jnp.allclose(out_g1, ref, atol=5e-2, rtol=5e-2), (
        float(jnp.max(jnp.abs(out_g1 - ref))))

    print("KERNEL_OK")
</pallas_src>

<mosaic_0001>
module attributes {stable_mosaic.version = 11 : i64} {
  func.func @sparse_transformer_kernel(%arg0: i32, %arg1: memref<16x32xf32, #tpu.memory_space<vmem>>, %arg2: memref<16x32xf32, #tpu.memory_space<vmem>>, %arg3: memref<16x8xi32, #tpu.memory_space<vmem>>, %arg4: memref<32x32xbf16, #tpu.memory_space<vmem>>, %arg5: memref<1x32xf32, #tpu.memory_space<vmem>>, %arg6: memref<32x32xbf16, #tpu.memory_space<vmem>>, %arg7: memref<1x32xf32, #tpu.memory_space<vmem>>, %arg8: memref<32x32xbf16, #tpu.memory_space<vmem>>, %arg9: memref<1x32xf32, #tpu.memory_space<vmem>>, %arg10: memref<32x32xbf16, #tpu.memory_space<vmem>>, %arg11: memref<1x32xf32, #tpu.memory_space<vmem>>, %arg12: memref<1x32xf32, #tpu.memory_space<vmem>>, %arg13: memref<1x32xf32, #tpu.memory_space<vmem>>, %arg14: memref<32x64xbf16, #tpu.memory_space<vmem>>, %arg15: memref<1x64xf32, #tpu.memory_space<vmem>>, %arg16: memref<64x32xbf16, #tpu.memory_space<vmem>>, %arg17: memref<1x32xf32, #tpu.memory_space<vmem>>, %arg18: memref<1x32xf32, #tpu.memory_space<vmem>>, %arg19: memref<1x32xf32, #tpu.memory_space<vmem>>, %arg20: memref<16x32xf32, #tpu.memory_space<vmem>>) attributes {dimension_semantics = [#tpu.dimension_semantics<parallel>], iteration_bounds = array<i64: 2>, scalar_prefetch = 0 : i64, scratch_operands = 0 : i64, tpu.core_type = #tpu.core_type<tc>, window_params = [{transform_indices = @transform_0, window_bounds = array<i64: 16, 32>}, {transform_indices = @transform_1, window_bounds = array<i64: 16, 32>}, {transform_indices = @transform_2, window_bounds = array<i64: 16, 8>}, {pipeline_mode = #tpu.pipeline_mode<synchronous>, transform_indices = @transform_3, window_bounds = array<i64: 32, 32>}, {pipeline_mode = #tpu.pipeline_mode<synchronous>, transform_indices = @transform_4, window_bounds = array<i64: 1, 32>}, {pipeline_mode = #tpu.pipeline_mode<synchronous>, transform_indices = @transform_5, window_bounds = array<i64: 32, 32>}, {pipeline_mode = #tpu.pipeline_mode<synchronous>, transform_indices = @transform_6, window_bounds = array<i64: 1, 32>}, {pipeline_mode = #tpu.pipeline_mode<synchronous>, transform_indices = @transform_7, window_bounds = array<i64: 32, 32>}, {pipeline_mode = #tpu.pipeline_mode<synchronous>, transform_indices = @transform_8, window_bounds = array<i64: 1, 32>}, {pipeline_mode = #tpu.pipeline_mode<synchronous>, transform_indices = @transform_9, window_bounds = array<i64: 32, 32>}, {pipeline_mode = #tpu.pipeline_mode<synchronous>, transform_indices = @transform_10, window_bounds = array<i64: 1, 32>}, {pipeline_mode = #tpu.pipeline_mode<synchronous>, transform_indices = @transform_11, window_bounds = array<i64: 1, 32>}, {pipeline_mode = #tpu.pipeline_mode<synchronous>, transform_indices = @transform_12, window_bounds = array<i64: 1, 32>}, {pipeline_mode = #tpu.pipeline_mode<synchronous>, transform_indices = @transform_13, window_bounds = array<i64: 32, 64>}, {pipeline_mode = #tpu.pipeline_mode<synchronous>, transform_indices = @transform_14, window_bounds = array<i64: 1, 64>}, {pipeline_mode = #tpu.pipeline_mode<synchronous>, transform_indices = @transform_15, window_bounds = array<i64: 64, 32>}, {pipeline_mode = #tpu.pipeline_mode<synchronous>, transform_indices = @transform_16, window_bounds = array<i64: 1, 32>}, {pipeline_mode = #tpu.pipeline_mode<synchronous>, transform_indices = @transform_17, window_bounds = array<i64: 1, 32>}, {pipeline_mode = #tpu.pipeline_mode<synchronous>, transform_indices = @transform_18, window_bounds = array<i64: 1, 32>}, {transform_indices = @transform_19, window_bounds = array<i64: 16, 32>}]} {
    %c0 = arith.constant 0 : index
    %c0_0 = arith.constant 0 : index
    %0 = vector.load %arg1[%c0, %c0_0] : memref<16x32xf32, #tpu.memory_space<vmem>>, vector<16x32xf32>
    %c0_1 = arith.constant 0 : index
    %c0_2 = arith.constant 0 : index
    %1 = vector.load %arg2[%c0_1, %c0_2] : memref<16x32xf32, #tpu.memory_space<vmem>>, vector<16x32xf32>
    %c0_3 = arith.constant 0 : index
    %c0_4 = arith.constant 0 : index
    %2 = vector.load %arg3[%c0_3, %c0_4] : memref<16x8xi32, #tpu.memory_space<vmem>>, vector<16x8xi32>
    %3 = arith.truncf %0 : vector<16x32xf32> to vector<16x32xbf16>
    %4 = arith.truncf %1 : vector<16x32xf32> to vector<16x32xbf16>
    %c0_5 = arith.constant 0 : index
    %c0_6 = arith.constant 0 : index
    %5 = vector.load %arg4[%c0_5, %c0_6] : memref<32x32xbf16, #tpu.memory_space<vmem>>, vector<32x32xbf16>
    %cst = arith.constant dense<0.000000e+00> : vector<16x32xf32>
    %6 = tpu.matmul %3, %5, %cst {dimension_numbers = #tpu.dot_dimension_numbers<[1], [0], [0], [1], [0, 0, 1, 1], [], []>} : vector<16x32xbf16>, vector<32x32xbf16>, vector<16x32xf32> -> vector<16x32xf32>
    %c0_7 = arith.constant 0 : index
    %c0_8 = arith.constant 0 : index
    %7 = vector.load %arg5[%c0_7, %c0_8] : memref<1x32xf32, #tpu.memory_space<vmem>>, vector<1x32xf32>
    %8 = vector.broadcast %7 : vector<1x32xf32> to vector<16x32xf32>
    %9 = arith.addf %6, %8 : vector<16x32xf32>
    %cst_9 = arith.constant 0.353553385 : f32
    %10 = vector.broadcast %cst_9 : f32 to vector<16x32xf32>
    %11 = arith.mulf %9, %10 : vector<16x32xf32>
    %c0_10 = arith.constant 0 : index
    %c0_11 = arith.constant 0 : index
    %12 = vector.load %arg6[%c0_10, %c0_11] : memref<32x32xbf16, #tpu.memory_space<vmem>>, vector<32x32xbf16>
    %cst_12 = arith.constant dense<0.000000e+00> : vector<16x32xf32>
    %13 = tpu.matmul %4, %12, %cst_12 {dimension_numbers = #tpu.dot_dimension_numbers<[1], [0], [0], [1], [0, 0, 1, 1], [], []>} : vector<16x32xbf16>, vector<32x32xbf16>, vector<16x32xf32> -> vector<16x32xf32>
    %c0_13 = arith.constant 0 : index
    %c0_14 = arith.constant 0 : index
    %14 = vector.load %arg7[%c0_13, %c0_14] : memref<1x32xf32, #tpu.memory_space<vmem>>, vector<1x32xf32>
    %15 = vector.broadcast %14 : vector<1x32xf32> to vector<16x32xf32>
    %16 = arith.addf %13, %15 : vector<16x32xf32>
    %c0_15 = arith.constant 0 : index
    %c0_16 = arith.constant 0 : index
    %17 = vector.load %arg8[%c0_15, %c0_16] : memref<32x32xbf16, #tpu.memory_space<vmem>>, vector<32x32xbf16>
    %cst_17 = arith.constant dense<0.000000e+00> : vector<16x32xf32>
    %18 = tpu.matmul %4, %17, %cst_17 {dimension_numbers = #tpu.dot_dimension_numbers<[1], [0], [0], [1], [0, 0, 1, 1], [], []>} : vector<16x32xbf16>, vector<32x32xbf16>, vector<16x32xf32> -> vector<16x32xf32>
    %c0_18 = arith.constant 0 : index
    %c0_19 = arith.constant 0 : index
    %19 = vector.load %arg9[%c0_18, %c0_19] : memref<1x32xf32, #tpu.memory_space<vmem>>, vector<1x32xf32>
    %20 = vector.broadcast %19 : vector<1x32xf32> to vector<16x32xf32>
    %21 = arith.addf %18, %20 : vector<16x32xf32>
    %22 = arith.truncf %11 : vector<16x32xf32> to vector<16x32xbf16>
    %23 = arith.truncf %16 : vector<16x32xf32> to vector<16x32xbf16>
    %24 = arith.truncf %21 : vector<16x32xf32> to vector<16x32xbf16>
    %25 = tpu.iota {dimensions = array<i32: 1>} : vector<16x16xi32>
    %c0_i32 = arith.constant 0 : i32
    %26 = vector.broadcast %c0_i32 : i32 to vector<16x16xi32>
    %27 = vector.extract_strided_slice %2 {offsets = [0, 0], sizes = [16, 1], strides = [1, 1]} : vector<16x8xi32> to vector<16x1xi32>
    %28 = vector.broadcast %27 : vector<16x1xi32> to vector<16x16xi32>
    %29 = arith.cmpi eq, %28, %25 : vector<16x16xi32>
    %30 = arith.extui %29 : vector<16x16xi1> to vector<16x16xi32>
    %31 = arith.addi %26, %30 : vector<16x16xi32>
    %32 = vector.extract_strided_slice %2 {offsets = [0, 1], sizes = [16, 1], strides = [1, 1]} : vector<16x8xi32> to vector<16x1xi32>
    %33 = vector.broadcast %32 : vector<16x1xi32> to vector<16x16xi32>
    %34 = arith.cmpi eq, %33, %25 : vector<16x16xi32>
    %35 = arith.extui %34 : vector<16x16xi1> to vector<16x16xi32>
    %36 = arith.addi %31, %35 : vector<16x16xi32>
    %37 = vector.extract_strided_slice %2 {offsets = [0, 2], sizes = [16, 1], strides = [1, 1]} : vector<16x8xi32> to vector<16x1xi32>
    %38 = vector.broadcast %37 : vector<16x1xi32> to vector<16x16xi32>
    %39 = arith.cmpi eq, %38, %25 : vector<16x16xi32>
    %40 = arith.extui %39 : vector<16x16xi1> to vector<16x16xi32>
    %41 = arith.addi %36, %40 : vector<16x16xi32>
    %42 = vector.extract_strided_slice %2 {offsets = [0, 3], sizes = [16, 1], strides = [1, 1]} : vector<16x8xi32> to vector<16x1xi32>
    %43 = vector.broadcast %42 : vector<16x1xi32> to vector<16x16xi32>
    %44 = arith.cmpi eq, %43, %25 : vector<16x16xi32>
    %45 = arith.extui %44 : vector<16x16xi1> to vector<16x16xi32>
    %46 = arith.addi %41, %45 : vector<16x16xi32>
    %47 = vector.extract_strided_slice %2 {offsets = [0, 4], sizes = [16, 1], strides = [1, 1]} : vector<16x8xi32> to vector<16x1xi32>
    %48 = vector.broadcast %47 : vector<16x1xi32> to vector<16x16xi32>
    %49 = arith.cmpi eq, %48, %25 : vector<16x16xi32>
    %50 = arith.extui %49 : vector<16x16xi1> to vector<16x16xi32>
    %51 = arith.addi %46, %50 : vector<16x16xi32>
    %52 = vector.extract_strided_slice %2 {offsets = [0, 5], sizes = [16, 1], strides = [1, 1]} : vector<16x8xi32> to vector<16x1xi32>
    %53 = vector.broadcast %52 : vector<16x1xi32> to vector<16x16xi32>
    %54 = arith.cmpi eq, %53, %25 : vector<16x16xi32>
    %55 = arith.extui %54 : vector<16x16xi1> to vector<16x16xi32>
    %56 = arith.addi %51, %55 : vector<16x16xi32>
    %57 = vector.extract_strided_slice %2 {offsets = [0, 6], sizes = [16, 1], strides = [1, 1]} : vector<16x8xi32> to vector<16x1xi32>
    %58 = vector.broadcast %57 : vector<16x1xi32> to vector<16x16xi32>
    %59 = arith.cmpi eq, %58, %25 : vector<16x16xi32>
    %60 = arith.extui %59 : vector<16x16xi1> to vector<16x16xi32>
    %61 = arith.addi %56, %60 : vector<16x16xi32>
    %62 = vector.extract_strided_slice %2 {offsets = [0, 7], sizes = [16, 1], strides = [1, 1]} : vector<16x8xi32> to vector<16x1xi32>
    %63 = vector.broadcast %62 : vector<16x1xi32> to vector<16x16xi32>
    %64 = arith.cmpi eq, %63, %25 : vector<16x16xi32>
    %65 = arith.extui %64 : vector<16x16xi1> to vector<16x16xi32>
    %66 = arith.addi %61, %65 : vector<16x16xi32>
    %67 = arith.sitofp %66 : vector<16x16xi32> to vector<16x16xf32>
    %c0_i32_20 = arith.constant 0 : i32
    %68 = vector.broadcast %c0_i32_20 : i32 to vector<16x16xi32>
    %69 = arith.cmpi sgt, %66, %68 : vector<16x16xi32>
    %70 = math.log %67 : vector<16x16xf32>
    %cst_21 = arith.constant -1.000000e+30 : f32
    %71 = vector.broadcast %cst_21 : f32 to vector<16x16xf32>
    %72 = arith.select %69, %70, %71 : vector<16x16xi1>, vector<16x16xf32>
    %73 = vector.extract_strided_slice %22 {offsets = [0, 0], sizes = [16, 8], strides = [1, 1]} : vector<16x32xbf16> to vector<16x8xbf16>
    %74 = vector.extract_strided_slice %23 {offsets = [0, 0], sizes = [16, 8], strides = [1, 1]} : vector<16x32xbf16> to vector<16x8xbf16>
    %cst_22 = arith.constant dense<0.000000e+00> : vector<16x16xf32>
    %75 = tpu.matmul %73, %74, %cst_22 {dimension_numbers = #tpu.dot_dimension_numbers<[1], [1], [0], [0], [0, 0, 1, 0], [], []>} : vector<16x8xbf16>, vector<16x8xbf16>, vector<16x16xf32> -> vector<16x16xf32>
    %76 = arith.addf %75, %72 : vector<16x16xf32>
    %cst_23 = arith.constant dense<0xFF800000> : vector<16xf32>
    %77 = vector.multi_reduction <maximumf>, %76, %cst_23 [1] : vector<16x16xf32> to vector<16xf32>
    %78 = vector.shape_cast %77 : vector<16xf32> to vector<16x1xf32>
    %79 = vector.broadcast %78 : vector<16x1xf32> to vector<16x16xf32>
    %80 = arith.subf %76, %79 : vector<16x16xf32>
    %81 = math.exp %80 : vector<16x16xf32>
    %cst_24 = arith.constant dense<0.000000e+00> : vector<16xf32>
    %82 = vector.multi_reduction <add>, %81, %cst_24 [1] : vector<16x16xf32> to vector<16xf32>
    %83 = vector.shape_cast %82 : vector<16xf32> to vector<16x1xf32>
    %84 = tpu.reciprocal %83 {approx = true} : vector<16x1xf32> -> vector<16x1xf32>
    %85 = arith.truncf %81 : vector<16x16xf32> to vector<16x16xbf16>
    %86 = vector.extract_strided_slice %24 {offsets = [0, 0], sizes = [16, 8], strides = [1, 1]} : vector<16x32xbf16> to vector<16x8xbf16>
    %cst_25 = arith.constant dense<0.000000e+00> : vector<16x8xf32>
    %87 = tpu.matmul %85, %86, %cst_25 {dimension_numbers = #tpu.dot_dimension_numbers<[1], [0], [0], [1], [0, 0, 1, 1], [], []>} : vector<16x16xbf16>, vector<16x8xbf16>, vector<16x8xf32> -> vector<16x8xf32>
    %88 = vector.broadcast %84 : vector<16x1xf32> to vector<16x8xf32>
    %89 = arith.mulf %87, %88 : vector<16x8xf32>
    %90 = vector.extract_strided_slice %22 {offsets = [0, 8], sizes = [16, 8], strides = [1, 1]} : vector<16x32xbf16> to vector<16x8xbf16>
    %91 = vector.extract_strided_slice %23 {offsets = [0, 8], sizes = [16, 8], strides = [1, 1]} : vector<16x32xbf16> to vector<16x8xbf16>
    %cst_26 = arith.constant dense<0.000000e+00> : vector<16x16xf32>
    %92 = tpu.matmul %90, %91, %cst_26 {dimension_numbers = #tpu.dot_dimension_numbers<[1], [1], [0], [0], [0, 0, 1, 0], [], []>} : vector<16x8xbf16>, vector<16x8xbf16>, vector<16x16xf32> -> vector<16x16xf32>
    %93 = arith.addf %92, %72 : vector<16x16xf32>
    %cst_27 = arith.constant dense<0xFF800000> : vector<16xf32>
    %94 = vector.multi_reduction <maximumf>, %93, %cst_27 [1] : vector<16x16xf32> to vector<16xf32>
    %95 = vector.shape_cast %94 : vector<16xf32> to vector<16x1xf32>
    %96 = vector.broadcast %95 : vector<16x1xf32> to vector<16x16xf32>
    %97 = arith.subf %93, %96 : vector<16x16xf32>
    %98 = math.exp %97 : vector<16x16xf32>
    %cst_28 = arith.constant dense<0.000000e+00> : vector<16xf32>
    %99 = vector.multi_reduction <add>, %98, %cst_28 [1] : vector<16x16xf32> to vector<16xf32>
    %100 = vector.shape_cast %99 : vector<16xf32> to vector<16x1xf32>
    %101 = tpu.reciprocal %100 {approx = true} : vector<16x1xf32> -> vector<16x1xf32>
    %102 = arith.truncf %98 : vector<16x16xf32> to vector<16x16xbf16>
    %103 = vector.extract_strided_slice %24 {offsets = [0, 8], sizes = [16, 8], strides = [1, 1]} : vector<16x32xbf16> to vector<16x8xbf16>
    %cst_29 = arith.constant dense<0.000000e+00> : vector<16x8xf32>
    %104 = tpu.matmul %102, %103, %cst_29 {dimension_numbers = #tpu.dot_dimension_numbers<[1], [0], [0], [1], [0, 0, 1, 1], [], []>} : vector<16x16xbf16>, vector<16x8xbf16>, vector<16x8xf32> -> vector<16x8xf32>
    %105 = vector.broadcast %101 : vector<16x1xf32> to vector<16x8xf32>
    %106 = arith.mulf %104, %105 : vector<16x8xf32>
    %107 = vector.extract_strided_slice %22 {offsets = [0, 16], sizes = [16, 8], strides = [1, 1]} : vector<16x32xbf16> to vector<16x8xbf16>
    %108 = vector.extract_strided_slice %23 {offsets = [0, 16], sizes = [16, 8], strides = [1, 1]} : vector<16x32xbf16> to vector<16x8xbf16>
    %cst_30 = arith.constant dense<0.000000e+00> : vector<16x16xf32>
    %109 = tpu.matmul %107, %108, %cst_30 {dimension_numbers = #tpu.dot_dimension_numbers<[1], [1], [0], [0], [0, 0, 1, 0], [], []>} : vector<16x8xbf16>, vector<16x8xbf16>, vector<16x16xf32> -> vector<16x16xf32>
    %110 = arith.addf %109, %72 : vector<16x16xf32>
    %cst_31 = arith.constant dense<0xFF800000> : vector<16xf32>
    %111 = vector.multi_reduction <maximumf>, %110, %cst_31 [1] : vector<16x16xf32> to vector<16xf32>
    %112 = vector.shape_cast %111 : vector<16xf32> to vector<16x1xf32>
    %113 = vector.broadcast %112 : vector<16x1xf32> to vector<16x16xf32>
    %114 = arith.subf %110, %113 : vector<16x16xf32>
    %115 = math.exp %114 : vector<16x16xf32>
    %cst_32 = arith.constant dense<0.000000e+00> : vector<16xf32>
    %116 = vector.multi_reduction <add>, %115, %cst_32 [1] : vector<16x16xf32> to vector<16xf32>
    %117 = vector.shape_cast %116 : vector<16xf32> to vector<16x1xf32>
    %118 = tpu.reciprocal %117 {approx = true} : vector<16x1xf32> -> vector<16x1xf32>
    %119 = arith.truncf %115 : vector<16x16xf32> to vector<16x16xbf16>
    %120 = vector.extract_strided_slice %24 {offsets = [0, 16], sizes = [16, 8], strides = [1, 1]} : vector<16x32xbf16> to vector<16x8xbf16>
    %cst_33 = arith.constant dense<0.000000e+00> : vector<16x8xf32>
    %121 = tpu.matmul %119, %120, %cst_33 {dimension_numbers = #tpu.dot_dimension_numbers<[1], [0], [0], [1], [0, 0, 1, 1], [], []>} : vector<16x16xbf16>, vector<16x8xbf16>, vector<16x8xf32> -> vector<16x8xf32>
    %122 = vector.broadcast %118 : vector<16x1xf32> to vector<16x8xf32>
    %123 = arith.mulf %121, %122 : vector<16x8xf32>
    %124 = vector.extract_strided_slice %22 {offsets = [0, 24], sizes = [16, 8], strides = [1, 1]} : vector<16x32xbf16> to vector<16x8xbf16>
    %125 = vector.extract_strided_slice %23 {offsets = [0, 24], sizes = [16, 8], strides = [1, 1]} : vector<16x32xbf16> to vector<16x8xbf16>
    %cst_34 = arith.constant dense<0.000000e+00> : vector<16x16xf32>
    %126 = tpu.matmul %124, %125, %cst_34 {dimension_numbers = #tpu.dot_dimension_numbers<[1], [1], [0], [0], [0, 0, 1, 0], [], []>} : vector<16x8xbf16>, vector<16x8xbf16>, vector<16x16xf32> -> vector<16x16xf32>
    %127 = arith.addf %126, %72 : vector<16x16xf32>
    %cst_35 = arith.constant dense<0xFF800000> : vector<16xf32>
    %128 = vector.multi_reduction <maximumf>, %127, %cst_35 [1] : vector<16x16xf32> to vector<16xf32>
    %129 = vector.shape_cast %128 : vector<16xf32> to vector<16x1xf32>
    %130 = vector.broadcast %129 : vector<16x1xf32> to vector<16x16xf32>
    %131 = arith.subf %127, %130 : vector<16x16xf32>
    %132 = math.exp %131 : vector<16x16xf32>
    %cst_36 = arith.constant dense<0.000000e+00> : vector<16xf32>
    %133 = vector.multi_reduction <add>, %132, %cst_36 [1] : vector<16x16xf32> to vector<16xf32>
    %134 = vector.shape_cast %133 : vector<16xf32> to vector<16x1xf32>
    %135 = tpu.reciprocal %134 {approx = true} : vector<16x1xf32> -> vector<16x1xf32>
    %136 = arith.truncf %132 : vector<16x16xf32> to vector<16x16xbf16>
    %137 = vector.extract_strided_slice %24 {offsets = [0, 24], sizes = [16, 8], strides = [1, 1]} : vector<16x32xbf16> to vector<16x8xbf16>
    %cst_37 = arith.constant dense<0.000000e+00> : vector<16x8xf32>
    %138 = tpu.matmul %136, %137, %cst_37 {dimension_numbers = #tpu.dot_dimension_numbers<[1], [0], [0], [1], [0, 0, 1, 1], [], []>} : vector<16x16xbf16>, vector<16x8xbf16>, vector<16x8xf32> -> vector<16x8xf32>
    %139 = vector.broadcast %135 : vector<16x1xf32> to vector<16x8xf32>
    %140 = arith.mulf %138, %139 : vector<16x8xf32>
    %141 = tpu.concatenate %89, %106, %123, %140 in 1 : vector<16x8xf32>, vector<16x8xf32>, vector<16x8xf32>, vector<16x8xf32> -> vector<16x32xf32>
    %142 = arith.truncf %141 : vector<16x32xf32> to vector<16x32xbf16>
    %c0_38 = arith.constant 0 : index
    %c0_39 = arith.constant 0 : index
    %143 = vector.load %arg10[%c0_38, %c0_39] : memref<32x32xbf16, #tpu.memory_space<vmem>>, vector<32x32xbf16>
    %cst_40 = arith.constant dense<0.000000e+00> : vector<16x32xf32>
    %144 = tpu.matmul %142, %143, %cst_40 {dimension_numbers = #tpu.dot_dimension_numbers<[1], [0], [0], [1], [0, 0, 1, 1], [], []>} : vector<16x32xbf16>, vector<32x32xbf16>, vector<16x32xf32> -> vector<16x32xf32>
    %c0_41 = arith.constant 0 : index
    %c0_42 = arith.constant 0 : index
    %145 = vector.load %arg11[%c0_41, %c0_42] : memref<1x32xf32, #tpu.memory_space<vmem>>, vector<1x32xf32>
    %146 = vector.broadcast %145 : vector<1x32xf32> to vector<16x32xf32>
    %147 = arith.addf %144, %146 : vector<16x32xf32>
    %148 = arith.addf %147, %0 : vector<16x32xf32>
    %c0_43 = arith.constant 0 : index
    %c0_44 = arith.constant 0 : index
    %149 = vector.load %arg12[%c0_43, %c0_44] : memref<1x32xf32, #tpu.memory_space<vmem>>, vector<1x32xf32>
    %c0_45 = arith.constant 0 : index
    %c0_46 = arith.constant 0 : index
    %150 = vector.load %arg13[%c0_45, %c0_46] : memref<1x32xf32, #tpu.memory_space<vmem>>, vector<1x32xf32>
    %cst_47 = arith.constant dense<0.000000e+00> : vector<16xf32>
    %151 = vector.multi_reduction <add>, %148, %cst_47 [1] : vector<16x32xf32> to vector<16xf32>
    %152 = vector.shape_cast %151 : vector<16xf32> to vector<16x1xf32>
    %cst_48 = arith.constant 3.200000e+01 : f32
    %153 = vector.broadcast %cst_48 : f32 to vector<16x1xf32>
    %154 = arith.divf %152, %153 : vector<16x1xf32>
    %155 = vector.broadcast %154 : vector<16x1xf32> to vector<16x32xf32>
    %156 = arith.subf %148, %155 : vector<16x32xf32>
    %157 = arith.mulf %156, %156 : vector<16x32xf32>
    %cst_49 = arith.constant dense<0.000000e+00> : vector<16xf32>
    %158 = vector.multi_reduction <add>, %157, %cst_49 [1] : vector<16x32xf32> to vector<16xf32>
    %159 = vector.shape_cast %158 : vector<16xf32> to vector<16x1xf32>
    %cst_50 = arith.constant 3.200000e+01 : f32
    %160 = vector.broadcast %cst_50 : f32 to vector<16x1xf32>
    %161 = arith.divf %159, %160 : vector<16x1xf32>
    %162 = vector.broadcast %154 : vector<16x1xf32> to vector<16x32xf32>
    %163 = arith.subf %148, %162 : vector<16x32xf32>
    %cst_51 = arith.constant 9.99999974E-6 : f32
    %164 = vector.broadcast %cst_51 : f32 to vector<16x1xf32>
    %165 = arith.addf %161, %164 : vector<16x1xf32>
    %166 = math.rsqrt %165 : vector<16x1xf32>
    %167 = vector.broadcast %166 : vector<16x1xf32> to vector<16x32xf32>
    %168 = arith.mulf %163, %167 : vector<16x32xf32>
    %169 = vector.broadcast %149 : vector<1x32xf32> to vector<16x32xf32>
    %170 = arith.mulf %168, %169 : vector<16x32xf32>
    %171 = vector.broadcast %150 : vector<1x32xf32> to vector<16x32xf32>
    %172 = arith.addf %170, %171 : vector<16x32xf32>
    %173 = arith.truncf %172 : vector<16x32xf32> to vector<16x32xbf16>
    %c0_52 = arith.constant 0 : index
    %c0_53 = arith.constant 0 : index
    %174 = vector.load %arg14[%c0_52, %c0_53] : memref<32x64xbf16, #tpu.memory_space<vmem>>, vector<32x64xbf16>
    %cst_54 = arith.constant dense<0.000000e+00> : vector<16x64xf32>
    %175 = tpu.matmul %173, %174, %cst_54 {dimension_numbers = #tpu.dot_dimension_numbers<[1], [0], [0], [1], [0, 0, 1, 1], [], []>} : vector<16x32xbf16>, vector<32x64xbf16>, vector<16x64xf32> -> vector<16x64xf32>
    %c0_55 = arith.constant 0 : index
    %c0_56 = arith.constant 0 : index
    %176 = vector.load %arg15[%c0_55, %c0_56] : memref<1x64xf32, #tpu.memory_space<vmem>>, vector<1x64xf32>
    %177 = vector.broadcast %176 : vector<1x64xf32> to vector<16x64xf32>
    %178 = arith.addf %175, %177 : vector<16x64xf32>
    %cst_57 = arith.constant 0.000000e+00 : f32
    %179 = vector.broadcast %cst_57 : f32 to vector<16x64xf32>
    %180 = arith.maximumf %178, %179 : vector<16x64xf32>
    %181 = arith.truncf %180 : vector<16x64xf32> to vector<16x64xbf16>
    %c0_58 = arith.constant 0 : index
    %c0_59 = arith.constant 0 : index
    %182 = vector.load %arg16[%c0_58, %c0_59] : memref<64x32xbf16, #tpu.memory_space<vmem>>, vector<64x32xbf16>
    %cst_60 = arith.constant dense<0.000000e+00> : vector<16x32xf32>
    %183 = tpu.matmul %181, %182, %cst_60 {dimension_numbers = #tpu.dot_dimension_numbers<[1], [0], [0], [1], [0, 0, 1, 1], [], []>} : vector<16x64xbf16>, vector<64x32xbf16>, vector<16x32xf32> -> vector<16x32xf32>
    %c0_61 = arith.constant 0 : index
    %c0_62 = arith.constant 0 : index
    %184 = vector.load %arg17[%c0_61, %c0_62] : memref<1x32xf32, #tpu.memory_space<vmem>>, vector<1x32xf32>
    %185 = vector.broadcast %184 : vector<1x32xf32> to vector<16x32xf32>
    %186 = arith.addf %183, %185 : vector<16x32xf32>
    %187 = arith.addf %172, %186 : vector<16x32xf32>
    %c0_63 = arith.constant 0 : index
    %c0_64 = arith.constant 0 : index
    %188 = vector.load %arg18[%c0_63, %c0_64] : memref<1x32xf32, #tpu.memory_space<vmem>>, vector<1x32xf32>
    %c0_65 = arith.constant 0 : index
    %c0_66 = arith.constant 0 : index
    %189 = vector.load %arg19[%c0_65, %c0_66] : memref<1x32xf32, #tpu.memory_space<vmem>>, vector<1x32xf32>
    %cst_67 = arith.constant dense<0.000000e+00> : vector<16xf32>
    %190 = vector.multi_reduction <add>, %187, %cst_67 [1] : vector<16x32xf32> to vector<16xf32>
    %191 = vector.shape_cast %190 : vector<16xf32> to vector<16x1xf32>
    %cst_68 = arith.constant 3.200000e+01 : f32
    %192 = vector.broadcast %cst_68 : f32 to vector<16x1xf32>
    %193 = arith.divf %191, %192 : vector<16x1xf32>
    %194 = vector.broadcast %193 : vector<16x1xf32> to vector<16x32xf32>
    %195 = arith.subf %187, %194 : vector<16x32xf32>
    %196 = arith.mulf %195, %195 : vector<16x32xf32>
    %cst_69 = arith.constant dense<0.000000e+00> : vector<16xf32>
    %197 = vector.multi_reduction <add>, %196, %cst_69 [1] : vector<16x32xf32> to vector<16xf32>
    %198 = vector.shape_cast %197 : vector<16xf32> to vector<16x1xf32>
    %cst_70 = arith.constant 3.200000e+01 : f32
    %199 = vector.broadcast %cst_70 : f32 to vector<16x1xf32>
    %200 = arith.divf %198, %199 : vector<16x1xf32>
    %201 = vector.broadcast %193 : vector<16x1xf32> to vector<16x32xf32>
    %202 = arith.subf %187, %201 : vector<16x32xf32>
    %cst_71 = arith.constant 9.99999974E-6 : f32
    %203 = vector.broadcast %cst_71 : f32 to vector<16x1xf32>
    %204 = arith.addf %200, %203 : vector<16x1xf32>
    %205 = math.rsqrt %204 : vector<16x1xf32>
    %206 = vector.broadcast %205 : vector<16x1xf32> to vector<16x32xf32>
    %207 = arith.mulf %202, %206 : vector<16x32xf32>
    %208 = vector.broadcast %188 : vector<1x32xf32> to vector<16x32xf32>
    %209 = arith.mulf %207, %208 : vector<16x32xf32>
    %210 = vector.broadcast %189 : vector<1x32xf32> to vector<16x32xf32>
    %211 = arith.addf %209, %210 : vector<16x32xf32>
    %c0_72 = arith.constant 0 : index
    %c0_73 = arith.constant 0 : index
    %212 = vector.load %arg20[%c0_72, %c0_73] : memref<16x32xf32, #tpu.memory_space<vmem>>, vector<16x32xf32>
    tpu.vector_store %arg20[%c0_72, %c0_73], %211 {strides = array<i32>} : memref<16x32xf32, #tpu.memory_space<vmem>>, vector<16x32xf32>,
    return
  }
  func.func @transform_0(%arg0: i32) -> (i32, i32) {
    %c0_i32 = arith.constant 0 : i32
    %c0_i32_0 = arith.constant 0 : i32
    return %arg0, %c0_i32 : i32, i32
  }
  func.func @transform_1(%arg0: i32) -> (i32, i32) {
    %c0_i32 = arith.constant 0 : i32
    %c0_i32_0 = arith.constant 0 : i32
    return %arg0, %c0_i32 : i32, i32
  }
  func.func @transform_2(%arg0: i32) -> (i32, i32) {
    %c0_i32 = arith.constant 0 : i32
    %c0_i32_0 = arith.constant 0 : i32
    return %arg0, %c0_i32 : i32, i32
  }
  func.func @transform_3(%arg0: i32) -> (i32, i32) {
    %c0_i32 = arith.constant 0 : i32
    %c0_i32_0 = arith.constant 0 : i32
    %c0_i32_1 = arith.constant 0 : i32
    return %c0_i32, %c0_i32_0 : i32, i32
  }
  func.func @transform_4(%arg0: i32) -> (i32, i32) {
    %c0_i32 = arith.constant 0 : i32
    %c0_i32_0 = arith.constant 0 : i32
    %c0_i32_1 = arith.constant 0 : i32
    return %c0_i32, %c0_i32_0 : i32, i32
  }
  func.func @transform_5(%arg0: i32) -> (i32, i32) {
    %c0_i32 = arith.constant 0 : i32
    %c0_i32_0 = arith.constant 0 : i32
    %c0_i32_1 = arith.constant 0 : i32
    return %c0_i32, %c0_i32_0 : i32, i32
  }
  func.func @transform_6(%arg0: i32) -> (i32, i32) {
    %c0_i32 = arith.constant 0 : i32
    %c0_i32_0 = arith.constant 0 : i32
    %c0_i32_1 = arith.constant 0 : i32
    return %c0_i32, %c0_i32_0 : i32, i32
  }
  func.func @transform_7(%arg0: i32) -> (i32, i32) {
    %c0_i32 = arith.constant 0 : i32
    %c0_i32_0 = arith.constant 0 : i32
    %c0_i32_1 = arith.constant 0 : i32
    return %c0_i32, %c0_i32_0 : i32, i32
  }
  func.func @transform_8(%arg0: i32) -> (i32, i32) {
    %c0_i32 = arith.constant 0 : i32
    %c0_i32_0 = arith.constant 0 : i32
    %c0_i32_1 = arith.constant 0 : i32
    return %c0_i32, %c0_i32_0 : i32, i32
  }
  func.func @transform_9(%arg0: i32) -> (i32, i32) {
    %c0_i32 = arith.constant 0 : i32
    %c0_i32_0 = arith.constant 0 : i32
    %c0_i32_1 = arith.constant 0 : i32
    return %c0_i32, %c0_i32_0 : i32, i32
  }
  func.func @transform_10(%arg0: i32) -> (i32, i32) {
    %c0_i32 = arith.constant 0 : i32
    %c0_i32_0 = arith.constant 0 : i32
    %c0_i32_1 = arith.constant 0 : i32
    return %c0_i32, %c0_i32_0 : i32, i32
  }
  func.func @transform_11(%arg0: i32) -> (i32, i32) {
    %c0_i32 = arith.constant 0 : i32
    %c0_i32_0 = arith.constant 0 : i32
    %c0_i32_1 = arith.constant 0 : i32
    return %c0_i32, %c0_i32_0 : i32, i32
  }
  func.func @transform_12(%arg0: i32) -> (i32, i32) {
    %c0_i32 = arith.constant 0 : i32
    %c0_i32_0 = arith.constant 0 : i32
    %c0_i32_1 = arith.constant 0 : i32
    return %c0_i32, %c0_i32_0 : i32, i32
  }
  func.func @transform_13(%arg0: i32) -> (i32, i32) {
    %c0_i32 = arith.constant 0 : i32
    %c0_i32_0 = arith.constant 0 : i32
    %c0_i32_1 = arith.constant 0 : i32
    return %c0_i32, %c0_i32_0 : i32, i32
  }
  func.func @transform_14(%arg0: i32) -> (i32, i32) {
    %c0_i32 = arith.constant 0 : i32
    %c0_i32_0 = arith.constant 0 : i32
    %c0_i32_1 = arith.constant 0 : i32
    return %c0_i32, %c0_i32_0 : i32, i32
  }
  func.func @transform_15(%arg0: i32) -> (i32, i32) {
    %c0_i32 = arith.constant 0 : i32
    %c0_i32_0 = arith.constant 0 : i32
    %c0_i32_1 = arith.constant 0 : i32
    return %c0_i32, %c0_i32_0 : i32, i32
  }
  func.func @transform_16(%arg0: i32) -> (i32, i32) {
    %c0_i32 = arith.constant 0 : i32
    %c0_i32_0 = arith.constant 0 : i32
    %c0_i32_1 = arith.constant 0 : i32
    return %c0_i32, %c0_i32_0 : i32, i32
  }
  func.func @transform_17(%arg0: i32) -> (i32, i32) {
    %c0_i32 = arith.constant 0 : i32
    %c0_i32_0 = arith.constant 0 : i32
    %c0_i32_1 = arith.constant 0 : i32
    return %c0_i32, %c0_i32_0 : i32, i32
  }
  func.func @transform_18(%arg0: i32) -> (i32, i32) {
    %c0_i32 = arith.constant 0 : i32
    %c0_i32_0 = arith.constant 0 : i32
    %c0_i32_1 = arith.constant 0 : i32
    return %c0_i32, %c0_i32_0 : i32, i32
  }
  func.func @transform_19(%arg0: i32) -> (i32, i32) {
    %c0_i32 = arith.constant 0 : i32
    %c0_i32_0 = arith.constant 0 : i32
    return %arg0, %c0_i32 : i32, i32
  }
}

</mosaic_0001>

<llo_original>
// kernel: tpu_custom_call.1
$region0: #{tpu_custom_call.1}
  #allocation0 [shape = 'u32[]', space=smem, size = 0x4, offset = 0x4, fixed_abs, tag = 'smem constant byte address 0x4 - core index']
  #allocation1 [shape = 'u32[144,128]{1,0:T(1,128)}', space=vmem, size = 0x12000, scoped, tag = 'internal scratch']
  %s0 = inlined_call_operand.vmem [shape: f32[32,32], index: 0, kind: input, shape index: {}]
  %s1 = inlined_call_operand.vmem [shape: f32[32,32], index: 1, kind: input, shape index: {}]
  %s2 = inlined_call_operand.vmem [shape: s32[32,8], index: 2, kind: input, shape index: {}]
  %s3 = inlined_call_operand.hbm [shape: bf16[32,32], index: 3, kind: input, shape index: {}]
  %s4 = inlined_call_operand.vmem [shape: f32[1,32], index: 4, kind: input, shape index: {}]
  %s5 = inlined_call_operand.vmem [shape: bf16[32,32], index: 5, kind: input, shape index: {}]
  %s6 = inlined_call_operand.vmem [shape: f32[1,32], index: 6, kind: input, shape index: {}]
  %s7 = inlined_call_operand.hbm [shape: bf16[32,32], index: 7, kind: input, shape index: {}]
  %s8 = inlined_call_operand.vmem [shape: f32[1,32], index: 8, kind: input, shape index: {}]
  %s9 = inlined_call_operand.hbm [shape: bf16[32,32], index: 9, kind: input, shape index: {}]
  %s10 = inlined_call_operand.vmem [shape: f32[1,32], index: 10, kind: input, shape index: {}]
  %s11 = inlined_call_operand.vmem [shape: f32[1,32], index: 11, kind: input, shape index: {}]
  %s12 = inlined_call_operand.vmem [shape: f32[1,32], index: 12, kind: input, shape index: {}]
  %s13 = inlined_call_operand.hbm [shape: bf16[32,64], index: 13, kind: input, shape index: {}]
  %s14 = inlined_call_operand.vmem [shape: f32[1,64], index: 14, kind: input, shape index: {}]
  %s15 = inlined_call_operand.vmem [shape: bf16[64,32], index: 15, kind: input, shape index: {}]
  %s16 = inlined_call_operand.vmem [shape: f32[1,32], index: 16, kind: input, shape index: {}]
  %s17 = inlined_call_operand.vmem [shape: f32[1,32], index: 17, kind: input, shape index: {}]
  %s18 = inlined_call_operand.vmem [shape: f32[1,32], index: 18, kind: input, shape index: {}]
  %s19 = inlined_call_operand.hbm [shape: f32[32,32], index: 19, kind: output, shape index: {}]
  %s20 = sld [smem:[#allocation0]]
  $region125: #{tpu_custom_call.1} parent=0
    _
  %s22 = ssub.s32 1, %s20
  %s23 = scalar_select 0, %s22, %s20
  $region1: #{tpu_custom_call.1} parent=0
    #allocation2 [shape = 'u8[8192]{0}', space=vmem, size = 0x2000, scoped, tag = 'input window, operand 3, single buffered']
    #allocation3 [shape = 's32[2]{0}', space=sflag, size = 0x8, scoped, tag = 'scoped memory for tpu_custom_call.1']
    #allocation4 [shape = 's32[2]{0}', space=sflag, size = 0x8, scoped, tag = 'scoped memory for tpu_custom_call.1']
    #allocation5 [shape = 'u8[8192]{0}', space=vmem, size = 0x2000, scoped, tag = 'input window, operand 7, single buffered']
    #allocation6 [shape = 's32[1]{0}', space=sflag, size = 0x4, scoped, tag = 'scoped memory for tpu_custom_call.1']
    #allocation7 [shape = 'u8[8192]{0}', space=vmem, size = 0x2000, scoped, tag = 'input window, operand 9, single buffered']
    #allocation8 [shape = 'u8[8192]{0}', space=vmem, size = 0x2000, scoped, tag = 'input window, operand 13, single buffered']
    #allocation9 [shape = 's32[1]{0}', space=sflag, size = 0x4, scoped, tag = 'scoped memory for tpu_custom_call.1']
    #allocation10 [shape = 'u8[16384]{0}', space=vmem, size = 0x4000, scoped, tag = 'output window, operand 0']
    %24 = vsyncpa [#allocation3], 0
    %25 = vsyncpa [#allocation6], 0
    %26 = vsyncpa [#allocation9], 0
    %27 = vsyncpa [#allocation4], 0
    %s28 = scalar_lea.sflag [#allocation4], 1
    %29 = vsyncpa %s28, 0
    loop: start=0, step=1, limit=4
    $region2: #{tpu_custom_call.1} parent=1 // loop_pre_header
      _
    $region3: #{tpu_custom_call.1} parent=1 // loop_header
      %s31 = sphi 0, %s35
      %p32 = scmp.ge.s32.totalorder %s31, 4
      %s41 = sphi 0, %s43
      %s44 = sphi 0, %s41
      %s45 = sphi 0, %s44
      %s61 = sphi 0, %s45
      %s67 = sphi 0, %s69
      %s70 = sphi 0, %s67
      %s71 = sphi 0, %s70
      %s87 = sphi 0, %s71
      %s93 = sphi 0, %s95
      %s96 = sphi 0, %s93
      %s97 = sphi 0, %s96
      %s113 = sphi 0, %s97
      %s117 = sphi 0, %s117
      %s119 = sphi 0, %s117
      %s120 = sphi 0, %s119
      %s134 = sphi 0, %s120
      %s138 = sphi 0, %s138
      %s140 = sphi 0, %s138
      %s141 = sphi 0, %s140
      %s155 = sphi 0, %s141
      %s159 = sphi 0, %s159
      %s161 = sphi 0, %s159
      %s162 = sphi 0, %s161
      %s176 = sphi 0, %s162
      %s180 = sphi 0, %s180
      %s182 = sphi 0, %s180
      %s183 = sphi 0, %s182
      %s197 = sphi 0, %s183
      %s201 = sphi 0, %s201
      %s203 = sphi 0, %s201
      %s204 = sphi 0, %s203
      %s218 = sphi 0, %s204
      %s222 = sphi 0, %s222
      %s224 = sphi 0, %s222
      %s225 = sphi 0, %s224
      %s239 = sphi 0, %s225
      %s243 = sphi 0, %s243
      %s245 = sphi 0, %s243
      %s246 = sphi 0, %s245
      %s260 = sphi 0, %s246
      %s264 = sphi 0, %s264
      %s266 = sphi 0, %s264
      %s267 = sphi 0, %s266
      %s281 = sphi 0, %s267
      %s285 = sphi 0, %s285
      %s287 = sphi 0, %s285
      %s288 = sphi 0, %s287
      %s302 = sphi 0, %s288
      %s306 = sphi 0, %s306
      %s308 = sphi 0, %s306
      %s309 = sphi 0, %s308
      %s323 = sphi 0, %s309
      %s327 = sphi 0, %s327
      %s329 = sphi 0, %s327
      %s330 = sphi 0, %s329
      %s344 = sphi 0, %s330
      %s348 = sphi 0, %s348
      %s350 = sphi 0, %s348
      %s351 = sphi 0, %s350
      %s365 = sphi 0, %s351
      %s369 = sphi 0, %s369
      %s371 = sphi 0, %s369
      %s372 = sphi 0, %s371
      %s386 = sphi 0, %s372
      %s390 = sphi 0, %s390
      %s392 = sphi 0, %s390
      %s393 = sphi 0, %s392
      %s407 = sphi 0, %s393
      %s411 = sphi 0, %s411
      %s413 = sphi 0, %s411
      %s414 = sphi 0, %s413
      %s428 = sphi 0, %s414
      %s432 = sphi 0, %s432
      %s434 = sphi 0, %s432
      %s435 = sphi 0, %s434
      %s449 = sphi 0, %s435
      %s455 = sphi 0, %s457
      %s458 = sphi 0, %s455
      %s459 = sphi 0, %s458
      %s475 = sphi 0, %s459
    $region4: #{tpu_custom_call.1} parent=1 // loop_header_branch
      %34 = sbr.rel (%p32) target = $region8
    $region5: #{tpu_custom_call.1} parent=1 // loop_body
      %s36 = ssub.s32 %s31, 1
      %s37 = ssub.s32 %s31, 2
      %s38 = sadd.s32 %s31, 1
      %s39 = ssub.s32 %s31, %s38
      %p40 = scmp.eq.s32.totalorder %s39, 0
      %s42 = sadd.s32 %s41, 1
      %s43 = scalar_select %p40, %s41, %s42
      %p46 = pneg %p40
      %p47 = scmp.eq.s32.totalorder %s31, 1
      %p48 = por %p46, %p47
      %p49 = scmp.ne.s32.totalorder %s41, %s44
      %p50 = scmp.eq.s32.totalorder %s31, 0
      %p51 = por %p49, %p50
      %p52 = scmp.ne.s32.totalorder %s41, %s44
      %p53 = scmp.eq.s32.totalorder %s36, 1
      %p54 = por %p52, %p53
      %p55 = scmp.ne.s32.totalorder %s44, %s45
      %p56 = scmp.eq.s32.totalorder %s36, 0
      %p57 = por %p55, %p56
      %p58 = scmp.ne.s32.totalorder %s44, %s45
      %p59 = scmp.eq.s32.totalorder %s37, 1
      %p60 = por %p58, %p59
      %p62 = scmp.ne.s32.totalorder %s45, %s61
      %p63 = scmp.eq.s32.totalorder %s37, 0
      %p64 = por %p62, %p63
      %s65 = ssub.s32 %s31, %s38
      %p66 = scmp.eq.s32.totalorder %s65, 0
      %s68 = sadd.s32 %s67, 1
      %s69 = scalar_select %p66, %s67, %s68
      %p72 = pneg %p66
      %p73 = scmp.eq.s32.totalorder %s31, 1
      %p74 = por %p72, %p73
      %p75 = scmp.ne.s32.totalorder %s67, %s70
      %p76 = scmp.eq.s32.totalorder %s31, 0
      %p77 = por %p75, %p76
      %p78 = scmp.ne.s32.totalorder %s67, %s70
      %p79 = scmp.eq.s32.totalorder %s36, 1
      %p80 = por %p78, %p79
      %p81 = scmp.ne.s32.totalorder %s70, %s71
      %p82 = scmp.eq.s32.totalorder %s36, 0
      %p83 = por %p81, %p82
      %p84 = scmp.ne.s32.totalorder %s70, %s71
      %p85 = scmp.eq.s32.totalorder %s37, 1
      %p86 = por %p84, %p85
      %p88 = scmp.ne.s32.totalorder %s71, %s87
      %p89 = scmp.eq.s32.totalorder %s37, 0
      %p90 = por %p88, %p89
      %s91 = ssub.s32 %s31, %s38
      %p92 = scmp.eq.s32.totalorder %s91, 0
      %s94 = sadd.s32 %s93, 1
      %s95 = scalar_select %p92, %s93, %s94
      %p98 = pneg %p92
      %p99 = scmp.eq.s32.totalorder %s31, 1
      %p100 = por %p98, %p99
      %p101 = scmp.ne.s32.totalorder %s93, %s96
      %p102 = scmp.eq.s32.totalorder %s31, 0
      %p103 = por %p101, %p102
      %p104 = scmp.ne.s32.totalorder %s93, %s96
      %p105 = scmp.eq.s32.totalorder %s36, 1
      %p106 = por %p104, %p105
      %p107 = scmp.ne.s32.totalorder %s96, %s97
      %p108 = scmp.eq.s32.totalorder %s36, 0
      %p109 = por %p107, %p108
      %p110 = scmp.ne.s32.totalorder %s96, %s97
      %p111 = scmp.eq.s32.totalorder %s37, 1
      %p112 = por %p110, %p111
      %p114 = scmp.ne.s32.totalorder %s97, %s113
      %p115 = scmp.eq.s32.totalorder %s37, 0
      %p116 = por %p114, %p115
      %s118 = sadd.s32 %s117, 1
      %p121 = scmp.eq.s32.totalorder %s31, 1
      %p122 = scmp.ne.s32.totalorder %s117, %s119
      %p123 = scmp.eq.s32.totalorder %s31, 0
      %p124 = por %p122, %p123
      %p125 = scmp.ne.s32.totalorder %s117, %s119
      %p126 = scmp.eq.s32.totalorder %s36, 1
      %p127 = por %p125, %p126
      %p128 = scmp.ne.s32.totalorder %s119, %s120
      %p129 = scmp.eq.s32.totalorder %s36, 0
      %p130 = por %p128, %p129
      %p131 = scmp.ne.s32.totalorder %s119, %s120
      %p132 = scmp.eq.s32.totalorder %s37, 1
      %p133 = por %p131, %p132
      %p135 = scmp.ne.s32.totalorder %s120, %s134
      %p136 = scmp.eq.s32.totalorder %s37, 0
      %p137 = por %p135, %p136
      %s139 = sadd.s32 %s138, 1
      %p142 = scmp.eq.s32.totalorder %s31, 1
      %p143 = scmp.ne.s32.totalorder %s138, %s140
      %p144 = scmp.eq.s32.totalorder %s31, 0
      %p145 = por %p143, %p144
      %p146 = scmp.ne.s32.totalorder %s138, %s140
      %p147 = scmp.eq.s32.totalorder %s36, 1
      %p148 = por %p146, %p147
      %p149 = scmp.ne.s32.totalorder %s140, %s141
      %p150 = scmp.eq.s32.totalorder %s36, 0
      %p151 = por %p149, %p150
      %p152 = scmp.ne.s32.totalorder %s140, %s141
      %p153 = scmp.eq.s32.totalorder %s37, 1
      %p154 = por %p152, %p153
      %p156 = scmp.ne.s32.totalorder %s141, %s155
      %p157 = scmp.eq.s32.totalorder %s37, 0
      %p158 = por %p156, %p157
      %s160 = sadd.s32 %s159, 1
      %p163 = scmp.eq.s32.totalorder %s31, 1
      %p164 = scmp.ne.s32.totalorder %s159, %s161
      %p165 = scmp.eq.s32.totalorder %s31, 0
      %p166 = por %p164, %p165
      %p167 = scmp.ne.s32.totalorder %s159, %s161
      %p168 = scmp.eq.s32.totalorder %s36, 1
      %p169 = por %p167, %p168
      %p170 = scmp.ne.s32.totalorder %s161, %s162
      %p171 = scmp.eq.s32.totalorder %s36, 0
      %p172 = por %p170, %p171
      %p173 = scmp.ne.s32.totalorder %s161, %s162
      %p174 = scmp.eq.s32.totalorder %s37, 1
      %p175 = por %p173, %p174
      %p177 = scmp.ne.s32.totalorder %s162, %s176
      %p178 = scmp.eq.s32.totalorder %s37, 0
      %p179 = por %p177, %p178
      %s181 = sadd.s32 %s180, 1
      %p184 = scmp.eq.s32.totalorder %s31, 1
      %p185 = scmp.ne.s32.totalorder %s180, %s182
      %p186 = scmp.eq.s32.totalorder %s31, 0
      %p187 = por %p185, %p186
      %p188 = scmp.ne.s32.totalorder %s180, %s182
      %p189 = scmp.eq.s32.totalorder %s36, 1
      %p190 = por %p188, %p189
      %p191 = scmp.ne.s32.totalorder %s182, %s183
      %p192 = scmp.eq.s32.totalorder %s36, 0
      %p193 = por %p191, %p192
      %p194 = scmp.ne.s32.totalorder %s182, %s183
      %p195 = scmp.eq.s32.totalorder %s37, 1
      %p196 = por %p194, %p195
      %p198 = scmp.ne.s32.totalorder %s183, %s197
      %p199 = scmp.eq.s32.totalorder %s37, 0
      %p200 = por %p198, %p199
      %s202 = sadd.s32 %s201, 1
      %p205 = scmp.eq.s32.totalorder %s31, 1
      %p206 = scmp.ne.s32.totalorder %s201, %s203
      %p207 = scmp.eq.s32.totalorder %s31, 0
      %p208 = por %p206, %p207
      %p209 = scmp.ne.s32.totalorder %s201, %s203
      %p210 = scmp.eq.s32.totalorder %s36, 1
      %p211 = por %p209, %p210
      %p212 = scmp.ne.s32.totalorder %s203, %s204
      %p213 = scmp.eq.s32.totalorder %s36, 0
      %p214 = por %p212, %p213
      %p215 = scmp.ne.s32.totalorder %s203, %s204
      %p216 = scmp.eq.s32.totalorder %s37, 1
      %p217 = por %p215, %p216
      %p219 = scmp.ne.s32.totalorder %s204, %s218
      %p220 = scmp.eq.s32.totalorder %s37, 0
      %p221 = por %p219, %p220
      %s223 = sadd.s32 %s222, 1
      %p226 = scmp.eq.s32.totalorder %s31, 1
      %p227 = scmp.ne.s32.totalorder %s222, %s224
      %p228 = scmp.eq.s32.totalorder %s31, 0
      %p229 = por %p227, %p228
      %p230 = scmp.ne.s32.totalorder %s222, %s224
      %p231 = scmp.eq.s32.totalorder %s36, 1
      %p232 = por %p230, %p231
      %p233 = scmp.ne.s32.totalorder %s224, %s225
      %p234 = scmp.eq.s32.totalorder %s36, 0
      %p235 = por %p233, %p234
      %p236 = scmp.ne.s32.totalorder %s224, %s225
      %p237 = scmp.eq.s32.totalorder %s37, 1
      %p238 = por %p236, %p237
      %p240 = scmp.ne.s32.totalorder %s225, %s239
      %p241 = scmp.eq.s32.totalorder %s37, 0
      %p242 = por %p240, %p241
      %s244 = sadd.s32 %s243, 1
      %p247 = scmp.eq.s32.totalorder %s31, 1
      %p248 = scmp.ne.s32.totalorder %s243, %s245
      %p249 = scmp.eq.s32.totalorder %s31, 0
      %p250 = por %p248, %p249
      %p251 = scmp.ne.s32.totalorder %s243, %s245
      %p252 = scmp.eq.s32.totalorder %s36, 1
      %p253 = por %p251, %p252
      %p254 = scmp.ne.s32.totalorder %s245, %s246
      %p255 = scmp.eq.s32.totalorder %s36, 0
      %p256 = por %p254, %p255
      %p257 = scmp.ne.s32.totalorder %s245, %s246
      %p258 = scmp.eq.s32.totalorder %s37, 1
      %p259 = por %p257, %p258
      %p261 = scmp.ne.s32.totalorder %s246, %s260
      %p262 = scmp.eq.s32.totalorder %s37, 0
      %p263 = por %p261, %p262
      %s265 = sadd.s32 %s264, 1
      %p268 = scmp.eq.s32.totalorder %s31, 1
      %p269 = scmp.ne.s32.totalorder %s264, %s266
      %p270 = scmp.eq.s32.totalorder %s31, 0
      %p271 = por %p269, %p270
      %p272 = scmp.ne.s32.totalorder %s264, %s266
      %p273 = scmp.eq.s32.totalorder %s36, 1
      %p274 = por %p272, %p273
      %p275 = scmp.ne.s32.totalorder %s266, %s267
      %p276 = scmp.eq.s32.totalorder %s36, 0
      %p277 = por %p275, %p276
      %p278 = scmp.ne.s32.totalorder %s266, %s267
      %p279 = scmp.eq.s32.totalorder %s37, 1
      %p280 = por %p278, %p279
      %p282 = scmp.ne.s32.totalorder %s267, %s281
      %p283 = scmp.eq.s32.totalorder %s37, 0
      %p284 = por %p282, %p283
      %s286 = sadd.s32 %s285, 1
      %p289 = scmp.eq.s32.totalorder %s31, 1
      %p290 = scmp.ne.s32.totalorder %s285, %s287
      %p291 = scmp.eq.s32.totalorder %s31, 0
      %p292 = por %p290, %p291
      %p293 = scmp.ne.s32.totalorder %s285, %s287
      %p294 = scmp.eq.s32.totalorder %s36, 1
      %p295 = por %p293, %p294
      %p296 = scmp.ne.s32.totalorder %s287, %s288
      %p297 = scmp.eq.s32.totalorder %s36, 0
      %p298 = por %p296, %p297
      %p299 = scmp.ne.s32.totalorder %s287, %s288
      %p300 = scmp.eq.s32.totalorder %s37, 1
      %p301 = por %p299, %p300
      %p303 = scmp.ne.s32.totalorder %s288, %s302
      %p304 = scmp.eq.s32.totalorder %s37, 0
      %p305 = por %p303, %p304
      %s307 = sadd.s32 %s306, 1
      %p310 = scmp.eq.s32.totalorder %s31, 1
      %p311 = scmp.ne.s32.totalorder %s306, %s308
      %p312 = scmp.eq.s32.totalorder %s31, 0
      %p313 = por %p311, %p312
      %p314 = scmp.ne.s32.totalorder %s306, %s308
      %p315 = scmp.eq.s32.totalorder %s36, 1
      %p316 = por %p314, %p315
      %p317 = scmp.ne.s32.totalorder %s308, %s309
      %p318 = scmp.eq.s32.totalorder %s36, 0
      %p319 = por %p317, %p318
      %p320 = scmp.ne.s32.totalorder %s308, %s309
      %p321 = scmp.eq.s32.totalorder %s37, 1
      %p322 = por %p320, %p321
      %p324 = scmp.ne.s32.totalorder %s309, %s323
      %p325 = scmp.eq.s32.totalorder %s37, 0
      %p326 = por %p324, %p325
      %s328 = sadd.s32 %s327, 1
      %p331 = scmp.eq.s32.totalorder %s31, 1
      %p332 = scmp.ne.s32.totalorder %s327, %s329
      %p333 = scmp.eq.s32.totalorder %s31, 0
      %p334 = por %p332, %p333
      %p335 = scmp.ne.s32.totalorder %s327, %s329
      %p336 = scmp.eq.s32.totalorder %s36, 1
      %p337 = por %p335, %p336
      %p338 = scmp.ne.s32.totalorder %s329, %s330
      %p339 = scmp.eq.s32.totalorder %s36, 0
      %p340 = por %p338, %p339
      %p341 = scmp.ne.s32.totalorder %s329, %s330
      %p342 = scmp.eq.s32.totalorder %s37, 1
      %p343 = por %p341, %p342
      %p345 = scmp.ne.s32.totalorder %s330, %s344
      %p346 = scmp.eq.s32.totalorder %s37, 0
      %p347 = por %p345, %p346
      %s349 = sadd.s32 %s348, 1
      %p352 = scmp.eq.s32.totalorder %s31, 1
      %p353 = scmp.ne.s32.totalorder %s348, %s350
      %p354 = scmp.eq.s32.totalorder %s31, 0
      %p355 = por %p353, %p354
      %p356 = scmp.ne.s32.totalorder %s348, %s350
      %p357 = scmp.eq.s32.totalorder %s36, 1
      %p358 = por %p356, %p357
      %p359 = scmp.ne.s32.totalorder %s350, %s351
      %p360 = scmp.eq.s32.totalorder %s36, 0
      %p361 = por %p359, %p360
      %p362 = scmp.ne.s32.totalorder %s350, %s351
      %p363 = scmp.eq.s32.totalorder %s37, 1
      %p364 = por %p362, %p363
      %p366 = scmp.ne.s32.totalorder %s351, %s365
      %p367 = scmp.eq.s32.totalorder %s37, 0
      %p368 = por %p366, %p367
      %s370 = sadd.s32 %s369, 1
      %p373 = scmp.eq.s32.totalorder %s31, 1
      %p374 = scmp.ne.s32.totalorder %s369, %s371
      %p375 = scmp.eq.s32.totalorder %s31, 0
      %p376 = por %p374, %p375
      %p377 = scmp.ne.s32.totalorder %s369, %s371
      %p378 = scmp.eq.s32.totalorder %s36, 1
      %p379 = por %p377, %p378
      %p380 = scmp.ne.s32.totalorder %s371, %s372
      %p381 = scmp.eq.s32.totalorder %s36, 0
      %p382 = por %p380, %p381
      %p383 = scmp.ne.s32.totalorder %s371, %s372
      %p384 = scmp.eq.s32.totalorder %s37, 1
      %p385 = por %p383, %p384
      %p387 = scmp.ne.s32.totalorder %s372, %s386
      %p388 = scmp.eq.s32.totalorder %s37, 0
      %p389 = por %p387, %p388
      %s391 = sadd.s32 %s390, 1
      %p394 = scmp.eq.s32.totalorder %s31, 1
      %p395 = scmp.ne.s32.totalorder %s390, %s392
      %p396 = scmp.eq.s32.totalorder %s31, 0
      %p397 = por %p395, %p396
      %p398 = scmp.ne.s32.totalorder %s390, %s392
      %p399 = scmp.eq.s32.totalorder %s36, 1
      %p400 = por %p398, %p399
      %p401 = scmp.ne.s32.totalorder %s392, %s393
      %p402 = scmp.eq.s32.totalorder %s36, 0
      %p403 = por %p401, %p402
      %p404 = scmp.ne.s32.totalorder %s392, %s393
      %p405 = scmp.eq.s32.totalorder %s37, 1
      %p406 = por %p404, %p405
      %p408 = scmp.ne.s32.totalorder %s393, %s407
      %p409 = scmp.eq.s32.totalorder %s37, 0
      %p410 = por %p408, %p409
      %s412 = sadd.s32 %s411, 1
      %p415 = scmp.eq.s32.totalorder %s31, 1
      %p416 = scmp.ne.s32.totalorder %s411, %s413
      %p417 = scmp.eq.s32.totalorder %s31, 0
      %p418 = por %p416, %p417
      %p419 = scmp.ne.s32.totalorder %s411, %s413
      %p420 = scmp.eq.s32.totalorder %s36, 1
      %p421 = por %p419, %p420
      %p422 = scmp.ne.s32.totalorder %s413, %s414
      %p423 = scmp.eq.s32.totalorder %s36, 0
      %p424 = por %p422, %p423
      %p425 = scmp.ne.s32.totalorder %s413, %s414
      %p426 = scmp.eq.s32.totalorder %s37, 1
      %p427 = por %p425, %p426
      %p429 = scmp.ne.s32.totalorder %s414, %s428
      %p430 = scmp.eq.s32.totalorder %s37, 0
      %p431 = por %p429, %p430
      %s433 = sadd.s32 %s432, 1
      %p436 = scmp.eq.s32.totalorder %s31, 1
      %p437 = scmp.ne.s32.totalorder %s432, %s434
      %p438 = scmp.eq.s32.totalorder %s31, 0
      %p439 = por %p437, %p438
      %p440 = scmp.ne.s32.totalorder %s432, %s434
      %p441 = scmp.eq.s32.totalorder %s36, 1
      %p442 = por %p440, %p441
      %p443 = scmp.ne.s32.totalorder %s434, %s435
      %p444 = scmp.eq.s32.totalorder %s36, 0
      %p445 = por %p443, %p444
      %p446 = scmp.ne.s32.totalorder %s434, %s435
      %p447 = scmp.eq.s32.totalorder %s37, 1
      %p448 = por %p446, %p447
      %p450 = scmp.ne.s32.totalorder %s435, %s449
      %p451 = scmp.eq.s32.totalorder %s37, 0
      %p452 = por %p450, %p451
      %s453 = ssub.s32 %s31, %s38
      %p454 = scmp.eq.s32.totalorder %s453, 0
      %s456 = sadd.s32 %s455, 1
      %s457 = scalar_select %p454, %s455, %s456
      %p460 = pneg %p454
      %p461 = scmp.eq.s32.totalorder %s31, 1
      %p462 = por %p460, %p461
      %p463 = scmp.ne.s32.totalorder %s455, %s458
      %p464 = scmp.eq.s32.totalorder %s31, 0
      %p465 = por %p463, %p464
      %p466 = scmp.ne.s32.totalorder %s455, %s458
      %p467 = scmp.eq.s32.totalorder %s36, 1
      %p468 = por %p466, %p467
      %p469 = scmp.ne.s32.totalorder %s458, %s459
      %p470 = scmp.eq.s32.totalorder %s36, 0
      %p471 = por %p469, %p470
      %p472 = scmp.ne.s32.totalorder %s458, %s459
      %p473 = scmp.eq.s32.totalorder %s37, 1
      %p474 = por %p472, %p473
      %p476 = scmp.ne.s32.totalorder %s459, %s475
      %p477 = scmp.eq.s32.totalorder %s37, 0
      %p478 = por %p476, %p477
      %p479 = scmp.le.s32.totalorder 1, %s31
      %p480 = scmp.lt.s32.totalorder %s31, 3
      %p481 = pnand %p479, %p480
      %p482 = pneg %p481
      // Predicated region
      $region9: #{tpu_custom_call.1} parent=5 // pred_check
        _
      $region10: #{tpu_custom_call.1} parent=5 // pred_check_branch
        %484 = sbr.rel (%p481) target = $region12
      $region11: #{tpu_custom_call.1} parent=5 // pred_region
        %s485 = ssub.s32 %s31, 1
        // Predicated region
        $region13: #{tpu_custom_call.1} parent=11 // pred_check
          %p486 = pneg %p130
        $region14: #{tpu_custom_call.1} parent=11 // pred_check_branch
          %488 = sbr.rel (%p486) target = $region16
        $region15: #{tpu_custom_call.1} parent=11 // pred_region
          %s490 = ssub.s32 256, 256
          %491 = vsyncadd [#allocation3], %s490
          %s492 = sshll.u32 [#allocation2], 4
          %s493 = int_to_ptr.vmem [resolvable:$true] %s492
          %498 = dma.hbm_to_vmem [thread:$0]  %s3, 256, %s493, [#allocation3], 64, 64, 4
        $region16: #{tpu_custom_call.1} parent=11 // pred_fallthru
          _
        // Predicated region
        $region17: #{tpu_custom_call.1} parent=11 // pred_check
          %p499 = pneg %p151
        $region18: #{tpu_custom_call.1} parent=11 // pred_check_branch
          %501 = sbr.rel (%p499) target = $region20
        $region19: #{tpu_custom_call.1} parent=11 // pred_region
          _
        $region20: #{tpu_custom_call.1} parent=11 // pred_fallthru
          _
        // Predicated region
        $region21: #{tpu_custom_call.1} parent=11 // pred_check
          %p502 = pneg %p172
        $region22: #{tpu_custom_call.1} parent=11 // pred_check_branch
          %504 = sbr.rel (%p502) target = $region24
        $region23: #{tpu_custom_call.1} parent=11 // pred_region
          _
        $region24: #{tpu_custom_call.1} parent=11 // pred_fallthru
          _
        // Predicated region
        $region25: #{tpu_custom_call.1} parent=11 // pred_check
          %p505 = pneg %p193
        $region26: #{tpu_custom_call.1} parent=11 // pred_check_branch
          %507 = sbr.rel (%p505) target = $region28
        $region27: #{tpu_custom_call.1} parent=11 // pred_region
          _
        $region28: #{tpu_custom_call.1} parent=11 // pred_fallthru
          _
        // Predicated region
        $region29: #{tpu_custom_call.1} parent=11 // pred_check
          %p508 = pneg %p214
        $region30: #{tpu_custom_call.1} parent=11 // pred_check_branch
          %510 = sbr.rel (%p508) target = $region32
        $region31: #{tpu_custom_call.1} parent=11 // pred_region
          %s512 = ssub.s32 256, 256
          %513 = vsyncadd [#allocation6], %s512
          %s514 = sshll.u32 [#allocation5], 4
          %s515 = int_to_ptr.vmem [resolvable:$true] %s514
          %520 = dma.hbm_to_vmem [thread:$0]  %s7, 256, %s515, [#allocation6], 64, 64, 4
        $region32: #{tpu_custom_call.1} parent=11 // pred_fallthru
          _
        // Predicated region
        $region33: #{tpu_custom_call.1} parent=11 // pred_check
          %p521 = pneg %p235
        $region34: #{tpu_custom_call.1} parent=11 // pred_check_branch
          %523 = sbr.rel (%p521) target = $region36
        $region35: #{tpu_custom_call.1} parent=11 // pred_region
          _
        $region36: #{tpu_custom_call.1} parent=11 // pred_fallthru
          _
        // Predicated region
        $region37: #{tpu_custom_call.1} parent=11 // pred_check
          %p524 = pneg %p256
        $region38: #{tpu_custom_call.1} parent=11 // pred_check_branch
          %526 = sbr.rel (%p524) target = $region40
        $region39: #{tpu_custom_call.1} parent=11 // pred_region
          %s528 = ssub.s32 256, 256
          %529 = vsyncadd [#allocation6], %s528
          %s530 = sshll.u32 [#allocation7], 4
          %s531 = int_to_ptr.vmem [resolvable:$true] %s530
          %536 = dma.hbm_to_vmem [thread:$0]  %s9, 256, %s531, [#allocation6], 64, 64, 4
        $region40: #{tpu_custom_call.1} parent=11 // pred_fallthru
          _
        // Predicated region
        $region41: #{tpu_custom_call.1} parent=11 // pred_check
          %p537 = pneg %p277
        $region42: #{tpu_custom_call.1} parent=11 // pred_check_branch
          %539 = sbr.rel (%p537) target = $region44
        $region43: #{tpu_custom_call.1} parent=11 // pred_region
          _
        $region44: #{tpu_custom_call.1} parent=11 // pred_fallthru
          _
        // Predicated region
        $region45: #{tpu_custom_call.1} parent=11 // pred_check
          %p540 = pneg %p298
        $region46: #{tpu_custom_call.1} parent=11 // pred_check_branch
          %542 = sbr.rel (%p540) target = $region48
        $region47: #{tpu_custom_call.1} parent=11 // pred_region
          _
        $region48: #{tpu_custom_call.1} parent=11 // pred_fallthru
          _
        // Predicated region
        $region49: #{tpu_custom_call.1} parent=11 // pred_check
          %p543 = pneg %p319
        $region50: #{tpu_custom_call.1} parent=11 // pred_check_branch
          %545 = sbr.rel (%p543) target = $region52
        $region51: #{tpu_custom_call.1} parent=11 // pred_region
          _
        $region52: #{tpu_custom_call.1} parent=11 // pred_fallthru
          _
        // Predicated region
        $region53: #{tpu_custom_call.1} parent=11 // pred_check
          %p546 = pneg %p340
        $region54: #{tpu_custom_call.1} parent=11 // pred_check_branch
          %548 = sbr.rel (%p546) target = $region56
        $region55: #{tpu_custom_call.1} parent=11 // pred_region
          %s550 = ssub.s32 256, 256
          %551 = vsyncadd [#allocation9], %s550
          %s552 = sshll.u32 [#allocation8], 4
          %s553 = int_to_ptr.vmem [resolvable:$true] %s552
          %558 = dma.hbm_to_vmem [thread:$0]  %s13, 256, %s553, [#allocation9], 64, 64, 4
        $region56: #{tpu_custom_call.1} parent=11 // pred_fallthru
          _
        // Predicated region
        $region57: #{tpu_custom_call.1} parent=11 // pred_check
          %p559 = pneg %p361
        $region58: #{tpu_custom_call.1} parent=11 // pred_check_branch
          %561 = sbr.rel (%p559) target = $region60
        $region59: #{tpu_custom_call.1} parent=11 // pred_region
          _
        $region60: #{tpu_custom_call.1} parent=11 // pred_fallthru
          _
        // Predicated region
        $region61: #{tpu_custom_call.1} parent=11 // pred_check
          %p562 = pneg %p382
        $region62: #{tpu_custom_call.1} parent=11 // pred_check_branch
          %564 = sbr.rel (%p562) target = $region64
        $region63: #{tpu_custom_call.1} parent=11 // pred_region
          _
        $region64: #{tpu_custom_call.1} parent=11 // pred_fallthru
          _
        // Predicated region
        $region65: #{tpu_custom_call.1} parent=11 // pred_check
          %p565 = pneg %p403
        $region66: #{tpu_custom_call.1} parent=11 // pred_check_branch
          %567 = sbr.rel (%p565) target = $region68
        $region67: #{tpu_custom_call.1} parent=11 // pred_region
          _
        $region68: #{tpu_custom_call.1} parent=11 // pred_fallthru
          _
        // Predicated region
        $region69: #{tpu_custom_call.1} parent=11 // pred_check
          %p568 = pneg %p424
        $region70: #{tpu_custom_call.1} parent=11 // pred_check_branch
          %570 = sbr.rel (%p568) target = $region72
        $region71: #{tpu_custom_call.1} parent=11 // pred_region
          _
        $region72: #{tpu_custom_call.1} parent=11 // pred_fallthru
          _
        // Predicated region
        $region73: #{tpu_custom_call.1} parent=11 // pred_check
          %p571 = pneg %p445
        $region74: #{tpu_custom_call.1} parent=11 // pred_check_branch
          %573 = sbr.rel (%p571) target = $region76
        $region75: #{tpu_custom_call.1} parent=11 // pred_region
          _
        $region76: #{tpu_custom_call.1} parent=11 // pred_fallthru
          _
      $region12: #{tpu_custom_call.1} parent=5 // pred_fallthru
        _
      %p574 = scmp.lt.s32.totalorder %s31, 2
      // Predicated region
      $region77: #{tpu_custom_call.1} parent=5 // pred_check
        %p575 = pneg %p574
      $region78: #{tpu_custom_call.1} parent=5 // pred_check_branch
        %577 = sbr.rel (%p575) target = $region80
      $region79: #{tpu_custom_call.1} parent=5 // pred_region
        // Predicated region
        $region81: #{tpu_custom_call.1} parent=79 // pred_check
          %p578 = pneg %p51
        $region82: #{tpu_custom_call.1} parent=79 // pred_check_branch
          %580 = sbr.rel (%p578) target = $region84
        $region83: #{tpu_custom_call.1} parent=79 // pred_region
          %s581 = smul.u32 2, %s31
          %p582 = scmp.lt.s32.totalorder %s581, 3
          %s583 = scalar_select %p582, %s581, 3
          %s584 = smul.addr %s583, 8
          %s585 = scalar_lea.vmem %s0, %s584
          %s586 = smul.u32 2, %s31
        $region84: #{tpu_custom_call.1} parent=79 // pred_fallthru
          _
        // Predicated region
        $region85: #{tpu_custom_call.1} parent=79 // pred_check
          %p587 = pneg %p77
        $region86: #{tpu_custom_call.1} parent=79 // pred_check_branch
          %589 = sbr.rel (%p587) target = $region88
        $region87: #{tpu_custom_call.1} parent=79 // pred_region
          %s590 = smul.u32 2, %s31
          %p591 = scmp.lt.s32.totalorder %s590, 3
          %s592 = scalar_select %p591, %s590, 3
          %s593 = smul.addr %s592, 8
          %s594 = scalar_lea.vmem %s1, %s593
          %s595 = smul.u32 2, %s31
        $region88: #{tpu_custom_call.1} parent=79 // pred_fallthru
          _
        // Predicated region
        $region89: #{tpu_custom_call.1} parent=79 // pred_check
          %p596 = pneg %p103
        $region90: #{tpu_custom_call.1} parent=79 // pred_check_branch
          %598 = sbr.rel (%p596) target = $region92
        $region91: #{tpu_custom_call.1} parent=79 // pred_region
          %s599 = smul.u32 2, %s31
          %p600 = scmp.lt.s32.totalorder %s599, 3
          %s601 = scalar_select %p600, %s599, 3
          %s602 = smul.addr %s601, 8
          %s603 = scalar_lea.vmem %s2, %s602
          %s604 = smul.u32 2, %s31
        $region92: #{tpu_custom_call.1} parent=79 // pred_fallthru
          _
      $region80: #{tpu_custom_call.1} parent=5 // pred_fallthru
        _
      %p605 = scmp.le.s32.totalorder 1, %s31
      %p606 = scmp.lt.s32.totalorder %s31, 3
      %p607 = pnand %p605, %p606
      %p608 = pneg %p607
      // Predicated region
      $region93: #{tpu_custom_call.1} parent=5 // pred_check
        _
      $region94: #{tpu_custom_call.1} parent=5 // pred_check_branch
        %610 = sbr.rel (%p607) target = $region96
      $region95: #{tpu_custom_call.1} parent=5 // pred_region
        %s611 = ssub.s32 %s31, 1
        // Predicated region
        $region97: #{tpu_custom_call.1} parent=95 // pred_check
          %p612 = pneg %p130
        $region98: #{tpu_custom_call.1} parent=95 // pred_check_branch
          %614 = sbr.rel (%p612) target = $region100
        $region99: #{tpu_custom_call.1} parent=95 // pred_region
          %615 = dma.done [#allocation3], 256
        $region100: #{tpu_custom_call.1} parent=95 // pred_fallthru
          _
        // Predicated region
        $region101: #{tpu_custom_call.1} parent=95 // pred_check
          %p616 = pneg %p214
        $region102: #{tpu_custom_call.1} parent=95 // pred_check_branch
          %618 = sbr.rel (%p616) target = $region104
        $region103: #{tpu_custom_call.1} parent=95 // pred_region
          %619 = dma.done [#allocation6], 256
        $region104: #{tpu_custom_call.1} parent=95 // pred_fallthru
          _
        // Predicated region
        $region105: #{tpu_custom_call.1} parent=95 // pred_check
          %p620 = pneg %p256
        $region106: #{tpu_custom_call.1} parent=95 // pred_check_branch
          %622 = sbr.rel (%p620) target = $region108
        $region107: #{tpu_custom_call.1} parent=95 // pred_region
          %623 = dma.done [#allocation6], 256
        $region108: #{tpu_custom_call.1} parent=95 // pred_fallthru
          _
        // Predicated region
        $region109: #{tpu_custom_call.1} parent=95 // pred_check
          %p624 = pneg %p340
        $region110: #{tpu_custom_call.1} parent=95 // pred_check_branch
          %626 = sbr.rel (%p624) target = $region112
        $region111: #{tpu_custom_call.1} parent=95 // pred_region
          %627 = dma.done [#allocation9], 256
        $region112: #{tpu_custom_call.1} parent=95 // pred_fallthru
          _
        %s628 = smul.u32 2, %s36
        %p629 = scmp.lt.s32.totalorder %s628, 3
        %s630 = scalar_select %p629, %s628, 3
        %s631 = smul.addr %s630, 8
        %s632 = scalar_lea.vmem %s0, %s631
        %p633 = pneg %p57
        %p634 = pneg %p54
        %s635 = smul.u32 2, %s36
        %p636 = scmp.lt.s32.totalorder %s635, 3
        %s637 = scalar_select %p636, %s635, 3
        %s638 = smul.addr %s637, 8
        %s639 = scalar_lea.vmem %s1, %s638
        %p640 = pneg %p83
        %p641 = pneg %p80
        %s642 = smul.u32 2, %s36
        %p643 = scmp.lt.s32.totalorder %s642, 3
        %s644 = scalar_select %p643, %s642, 3
        %s645 = smul.addr %s644, 8
        %s646 = scalar_lea.vmem %s2, %s645
        %p647 = pneg %p109
        %p648 = pneg %p106
        %p649 = pneg %p130
        %p650 = pneg %p127
        %p651 = pneg %p151
        %p652 = pneg %p148
        %p653 = pneg %p172
        %p654 = pneg %p169
        %p655 = pneg %p193
        %p656 = pneg %p190
        %p657 = pneg %p214
        %p658 = pneg %p211
        %p659 = pneg %p235
        %p660 = pneg %p232
        %p661 = pneg %p256
        %p662 = pneg %p253
        %p663 = pneg %p277
        %p664 = pneg %p274
        %p665 = pneg %p298
        %p666 = pneg %p295
        %p667 = pneg %p319
        %p668 = pneg %p316
        %p669 = pneg %p340
        %p670 = pneg %p337
        %p671 = pneg %p361
        %p672 = pneg %p358
        %p673 = pneg %p382
        %p674 = pneg %p379
        %p675 = pneg %p403
        %p676 = pneg %p400
        %p677 = pneg %p424
        %p678 = pneg %p421
        %p679 = pneg %p445
        %p680 = pneg %p442
        %p681 = pneg %p471
        %p682 = pneg %p468
        %s683 = sand.u32 %s458, 1
        %s684 = scalar_lea.sflag [#allocation4], %s683
        %s685 = sand.u32 %s458, 1
        %s686 = smul.addr %s685, 16
        %s687 = scalar_lea.vmem [#allocation10], %s686
        %s688 = smul.u32 2, %s36
        %p689 = scmp.lt.s32.totalorder %s688, 3
        %s690 = scalar_select %p689, %s688, 3
        %s691 = smul.addr %s690, 8
        %s692 = scalar_lea.vmem %s0, %s691
        %s693 = smul.u32 2, %s36
        %s694 = smul.u32 2, %s36
        %p695 = scmp.lt.s32.totalorder %s694, 3
        %s696 = scalar_select %p695, %s694, 3
        %s697 = smul.addr %s696, 8
        %s698 = scalar_lea.vmem %s1, %s697
        %s699 = smul.u32 2, %s36
        %s700 = smul.u32 2, %s36
        %p701 = scmp.lt.s32.totalorder %s700, 3
        %s702 = scalar_select %p701, %s700, 3
        %s703 = smul.addr %s702, 8
        %s704 = scalar_lea.vmem %s2, %s703
        %s705 = smul.u32 2, %s36
        %s706 = smul.u32 2, %s36
        %v708 = vld [vmem:[%s692] sm:$0xff]
        %v709 = vld [vmem:[%s692 + $0x8] sm:$0xff]
        %v710 = vld [vmem:[%s698] sm:$0xff]
        %v711 = vld [vmem:[%s698 + $0x8] sm:$0xff]
        %v712 = vld [vmem:[%s704] sm:$0xff]
        %v713 = vld [vmem:[%s704 + $0x8] sm:$0xff]
        %v714 = vpack.c.bf16 %v709, %v708
        %v715 = vpack.c.bf16 %v711, %v710
        %v716 = vld [vmem:[#allocation2] sm:$0xf]
        %v717 = vld [vmem:[#allocation2 + $0x4] sm:$0xf]
        %v718 = vld [vmem:[#allocation2 + $0x8] sm:$0xf]
        %v719 = vld [vmem:[#allocation2 + $0xc] sm:$0xf]
        %v720 = vld [vmem:[%s4] sm:$0x1]
        %v722 = vlaneseq
        %v723 = vshrl.u32 %v722, 7
        %v724 = vsub.s32 0, %v723
        %v725 = vrot.slane %v720, %v724
        %v731 = vunpack.c.l.b16 %v716
        %v732 = vunpack.c.l.b16 %v717
        %v733 = vunpack.c.l.b16 %v718
        %v734 = vunpack.c.l.b16 %v719
        %v735 = vpack.c.b16 %v732, %v731
        %v736 = vpack.c.b16 %v734, %v733
        %vm739 = vcmask 261120
        %v741 = vsel %vm739, %v714, 0
        %743 = vmatprep.subr.bf16.mxu0 0
        %744 = vmatpush1.bf16.msra.mxu0 0
        %745 = vmatprep.subr.bf16.mxu0 0
        %746 = vmatpush1.bf16.msra.mxu0 0
        %747 = vmatprep.subr.bf16.mxu0 0
        %748 = vmatpush1.bf16.msra.mxu0 0
        %749 = vmatprep.subr.bf16.mxu0 0
        %750 = vmatpush1.bf16.msra.mxu0 0
        %751 = vmatprep.subr.bf16.mxu0 0
        %752 = vmatpush1.bf16.msra.mxu0 0
        %753 = vmatprep.subr.bf16.mxu0 0
        %754 = vmatpush1.bf16.msra.mxu0 0
        %755 = vmatprep.subr.bf16.mxu0 0
        %756 = vmatpush1.bf16.msra.mxu0 %v736
        %757 = vmatprep.subr.bf16.mxu0 0
        %758 = vmatpush1.bf16.msra.mxu0 %v735
        %759 = vmatprep.subr.bf16.mxu0 0
        %760 = vmatpush2.bf16.msra.mxu0 0
        %761 = vmatprep.subr.bf16.mxu0 0
        %762 = vmatpush2.bf16.msra.mxu0 0
        %763 = vmatprep.subr.bf16.mxu0 0
        %764 = vmatpush2.bf16.msra.mxu0 0
        %765 = vmatprep.subr.bf16.mxu0 0
        %766 = vmatpush2.bf16.msra.mxu0 0
        %767 = vmatprep.subr.bf16.mxu0 0
        %768 = vmatpush2.bf16.msra.mxu0 0
        %769 = vmatprep.subr.bf16.mxu0 0
        %770 = vmatpush2.bf16.msra.mxu0 0
        %771 = vmatprep.subr.bf16.mxu0 0
        %772 = vmatpush2.bf16.msra.mxu0 0
        %773 = vmatprep.subr.bf16.mxu0 0
        %774 = vmatpush2.bf16.msra.mxu0 0
        %775 = vmatprep.mubr.bf16.mxu0 0
        %776 = vmatmul.mubr.bf16.gmra.mxu0 %v741
        %v777 = vpop.f32.mrf.mxu0
        %v778 = vadd.f32 %v725, %v777
        %v779 = vpop.f32.mrf.mxu0
        %v780 = vpop.f32.mrf.mxu0
        %v781 = vadd.f32 %v725, %v780
        %v782 = vpop.f32.mrf.mxu0
        %783 = vdwg.mxu0
        %v784 = vmul.f32 %v778, 0.35355338
        %v785 = vmul.f32 %v781, 0.35355338
        %v786 = vld [vmem:[%s5] sm:$0xf]
        %v787 = vld [vmem:[%s5 + $0x4] sm:$0xf]
        %v788 = vld [vmem:[%s5 + $0x8] sm:$0xf]
        %v789 = vld [vmem:[%s5 + $0xc] sm:$0xf]
        %v790 = vld [vmem:[%s6] sm:$0x1]
        %v792 = vlaneseq
        %v793 = vshrl.u32 %v792, 7
        %v794 = vsub.s32 0, %v793
        %v795 = vrot.slane %v790, %v794
        %v801 = vunpack.c.l.b16 %v786
        %v802 = vunpack.c.l.b16 %v787
        %v803 = vunpack.c.l.b16 %v788
        %v804 = vunpack.c.l.b16 %v789
        %v805 = vpack.c.b16 %v802, %v801
        %v806 = vpack.c.b16 %v804, %v803
        %v810 = vsel %vm739, %v715, 0
        %812 = vmatprep.subr.bf16.mxu0 0
        %813 = vmatpush1.bf16.msra.mxu0 0
        %814 = vmatprep.subr.bf16.mxu0 0
        %815 = vmatpush1.bf16.msra.mxu0 0
        %816 = vmatprep.subr.bf16.mxu0 0
        %817 = vmatpush1.bf16.msra.mxu0 0
        %818 = vmatprep.subr.bf16.mxu0 0
        %819 = vmatpush1.bf16.msra.mxu0 0
        %820 = vmatprep.subr.bf16.mxu0 0
        %821 = vmatpush1.bf16.msra.mxu0 0
        %822 = vmatprep.subr.bf16.mxu0 0
        %823 = vmatpush1.bf16.msra.mxu0 0
        %824 = vmatprep.subr.bf16.mxu0 0
        %825 = vmatpush1.bf16.msra.mxu0 %v806
        %826 = vmatprep.subr.bf16.mxu0 0
        %827 = vmatpush1.bf16.msra.mxu0 %v805
        %828 = vmatprep.subr.bf16.mxu0 0
        %829 = vmatpush2.bf16.msra.mxu0 0
        %830 = vmatprep.subr.bf16.mxu0 0
        %831 = vmatpush2.bf16.msra.mxu0 0
        %832 = vmatprep.subr.bf16.mxu0 0
        %833 = vmatpush2.bf16.msra.mxu0 0
        %834 = vmatprep.subr.bf16.mxu0 0
        %835 = vmatpush2.bf16.msra.mxu0 0
        %836 = vmatprep.subr.bf16.mxu0 0
        %837 = vmatpush2.bf16.msra.mxu0 0
        %838 = vmatprep.subr.bf16.mxu0 0
        %839 = vmatpush2.bf16.msra.mxu0 0
        %840 = vmatprep.subr.bf16.mxu0 0
        %841 = vmatpush2.bf16.msra.mxu0 0
        %842 = vmatprep.subr.bf16.mxu0 0
        %843 = vmatpush2.bf16.msra.mxu0 0
        %844 = vmatprep.mubr.bf16.mxu0 0
        %845 = vmatmul.mubr.bf16.gmra.mxu0 %v810
        %v846 = vpop.f32.mrf.mxu0
        %v847 = vadd.f32 %v795, %v846
        %v848 = vpop.f32.mrf.mxu0
        %v849 = vpop.f32.mrf.mxu0
        %v850 = vadd.f32 %v795, %v849
        %v851 = vpop.f32.mrf.mxu0
        %852 = vdwg.mxu0
        %v853 = vld [vmem:[#allocation5] sm:$0xf]
        %v854 = vld [vmem:[#allocation5 + $0x4] sm:$0xf]
        %v855 = vld [vmem:[#allocation5 + $0x8] sm:$0xf]
        %v856 = vld [vmem:[#allocation5 + $0xc] sm:$0xf]
        %v857 = vld [vmem:[%s8] sm:$0x1]
        %v859 = vlaneseq
        %v860 = vshrl.u32 %v859, 7
        %v861 = vsub.s32 0, %v860
        %v862 = vrot.slane %v857, %v861
        %v868 = vunpack.c.l.b16 %v853
        %v869 = vunpack.c.l.b16 %v854
        %v870 = vunpack.c.l.b16 %v855
        %v871 = vunpack.c.l.b16 %v856
        %v872 = vpack.c.b16 %v869, %v868
        %v873 = vpack.c.b16 %v871, %v870
        %876 = vmatprep.subr.bf16.mxu0 0
        %877 = vmatpush1.bf16.msra.mxu0 0
        %878 = vmatprep.subr.bf16.mxu0 0
        %879 = vmatpush1.bf16.msra.mxu0 0
        %880 = vmatprep.subr.bf16.mxu0 0
        %881 = vmatpush1.bf16.msra.mxu0 0
        %882 = vmatprep.subr.bf16.mxu0 0
        %883 = vmatpush1.bf16.msra.mxu0 0
        %884 = vmatprep.subr.bf16.mxu0 0
        %885 = vmatpush1.bf16.msra.mxu0 0
        %886 = vmatprep.subr.bf16.mxu0 0
        %887 = vmatpush1.bf16.msra.mxu0 0
        %888 = vmatprep.subr.bf16.mxu0 0
        %889 = vmatpush1.bf16.msra.mxu0 %v873
        %890 = vmatprep.subr.bf16.mxu0 0
        %891 = vmatpush1.bf16.msra.mxu0 %v872
        %892 = vmatprep.subr.bf16.mxu0 0
        %893 = vmatpush2.bf16.msra.mxu0 0
        %894 = vmatprep.subr.bf16.mxu0 0
        %895 = vmatpush2.bf16.msra.mxu0 0
        %896 = vmatprep.subr.bf16.mxu0 0
        %897 = vmatpush2.bf16.msra.mxu0 0
        %898 = vmatprep.subr.bf16.mxu0 0
        %899 = vmatpush2.bf16.msra.mxu0 0
        %900 = vmatprep.subr.bf16.mxu0 0
        %901 = vmatpush2.bf16.msra.mxu0 0
        %902 = vmatprep.subr.bf16.mxu0 0
        %903 = vmatpush2.bf16.msra.mxu0 0
        %904 = vmatprep.subr.bf16.mxu0 0
        %905 = vmatpush2.bf16.msra.mxu0 0
        %906 = vmatprep.subr.bf16.mxu0 0
        %907 = vmatpush2.bf16.msra.mxu0 0
        %908 = vmatprep.mubr.bf16.mxu0 0
        %909 = vmatmul.mubr.bf16.gmra.mxu0 %v810
        %v910 = vpop.f32.mrf.mxu0
        %v911 = vadd.f32 %v862, %v910
        %v912 = vpop.f32.mrf.mxu0
        %v913 = vpop.f32.mrf.mxu0
        %v914 = vadd.f32 %v862, %v913
        %v915 = vpop.f32.mrf.mxu0
        %916 = vdwg.mxu0
        %v917 = vpack.c.bf16 %v785, %v784
        %v918 = vpack.c.bf16 %v850, %v847
        %v919 = vpack.c.bf16 %v914, %v911
        %v920 = vlaneseq
        %v921 = vand.u32 %v920, 127
        %922 = vset.pattern.permute.xlu0 0
        %923 = vperm.xlu0 %922, %v712
        %v924 = vpop.permute.xlu0 %923
        %925 = vset.pattern.permute.xlu0 0
        %926 = vperm.xlu0 %925, %v713
        %v927 = vpop.permute.xlu0 %926
        %vm928 = vcmp.eq.s32.totalorder %v924, %v921
        %vm929 = vcmp.eq.s32.totalorder %v927, %v921
        %v930 = vsel %vm928, 1, 0
        %v931 = vsel %vm929, 1, 0
        %932 = vset.pattern.permute.xlu0 1
        %933 = vperm.xlu0 %932, %v712
        %v934 = vpop.permute.xlu0 %933
        %935 = vset.pattern.permute.xlu0 1
        %936 = vperm.xlu0 %935, %v713
        %v937 = vpop.permute.xlu0 %936
        %vm938 = vcmp.eq.s32.totalorder %v934, %v921
        %vm939 = vcmp.eq.s32.totalorder %v937, %v921
        %v940 = vsel %vm938, 1, 0
        %v941 = vsel %vm939, 1, 0
        %v942 = vadd.s32 %v930, %v940
        %v943 = vadd.s32 %v931, %v941
        %944 = vset.pattern.permute.xlu0 2
        %945 = vperm.xlu0 %944, %v712
        %v946 = vpop.permute.xlu0 %945
        %947 = vset.pattern.permute.xlu0 2
        %948 = vperm.xlu0 %947, %v713
        %v949 = vpop.permute.xlu0 %948
        %vm950 = vcmp.eq.s32.totalorder %v946, %v921
        %vm951 = vcmp.eq.s32.totalorder %v949, %v921
        %v952 = vsel %vm950, 1, 0
        %v953 = vsel %vm951, 1, 0
        %v954 = vadd.s32 %v942, %v952
        %v955 = vadd.s32 %v943, %v953
        %956 = vset.pattern.permute.xlu0 3
        %957 = vperm.xlu0 %956, %v712
        %v958 = vpop.permute.xlu0 %957
        %959 = vset.pattern.permute.xlu0 3
        %960 = vperm.xlu0 %959, %v713
        %v961 = vpop.permute.xlu0 %960
        %vm962 = vcmp.eq.s32.totalorder %v958, %v921
        %vm963 = vcmp.eq.s32.totalorder %v961, %v921
        %v964 = vsel %vm962, 1, 0
        %v965 = vsel %vm963, 1, 0
        %v966 = vadd.s32 %v954, %v964
        %v967 = vadd.s32 %v955, %v965
        %968 = vset.pattern.permute.xlu0 4
        %969 = vperm.xlu0 %968, %v712
        %v970 = vpop.permute.xlu0 %969
        %971 = vset.pattern.permute.xlu0 4
        %972 = vperm.xlu0 %971, %v713
        %v973 = vpop.permute.xlu0 %972
        %vm974 = vcmp.eq.s32.totalorder %v970, %v921
        %vm975 = vcmp.eq.s32.totalorder %v973, %v921
        %v976 = vsel %vm974, 1, 0
        %v977 = vsel %vm975, 1, 0
        %v978 = vadd.s32 %v966, %v976
        %v979 = vadd.s32 %v967, %v977
        %980 = vset.pattern.permute.xlu0 5
        %981 = vperm.xlu0 %980, %v712
        %v982 = vpop.permute.xlu0 %981
        %983 = vset.pattern.permute.xlu0 5
        %984 = vperm.xlu0 %983, %v713
        %v985 = vpop.permute.xlu0 %984
        %vm986 = vcmp.eq.s32.totalorder %v982, %v921
        %vm987 = vcmp.eq.s32.totalorder %v985, %v921
        %v988 = vsel %vm986, 1, 0
        %v989 = vsel %vm987, 1, 0
        %v990 = vadd.s32 %v978, %v988
        %v991 = vadd.s32 %v979, %v989
        %992 = vset.pattern.permute.xlu0 6
        %993 = vperm.xlu0 %992, %v712
        %v994 = vpop.permute.xlu0 %993
        %995 = vset.pattern.permute.xlu0 6
        %996 = vperm.xlu0 %995, %v713
        %v997 = vpop.permute.xlu0 %996
        %vm998 = vcmp.eq.s32.totalorder %v994, %v921
        %vm999 = vcmp.eq.s32.totalorder %v997, %v921
        %v1000 = vsel %vm998, 1, 0
        %v1001 = vsel %vm999, 1, 0
        %v1002 = vadd.s32 %v990, %v1000
        %v1003 = vadd.s32 %v991, %v1001
        %1004 = vset.pattern.permute.xlu0 7
        %1005 = vperm.xlu0 %1004, %v712
        %v1006 = vpop.permute.xlu0 %1005
        %1007 = vset.pattern.permute.xlu0 7
        %1008 = vperm.xlu0 %1007, %v713
        %v1009 = vpop.permute.xlu0 %1008
        %vm1010 = vcmp.eq.s32.totalorder %v1006, %v921
        %vm1011 = vcmp.eq.s32.totalorder %v1009, %v921
        %v1012 = vsel %vm1010, 1, 0
        %v1013 = vsel %vm1011, 1, 0
        %v1014 = vadd.s32 %v1002, %v1012
        %v1015 = vadd.s32 %v1003, %v1013
        %v1016 = vcvt.s32.f32 %v1014
        %v1017 = vcvt.s32.f32 %v1015
        %vm1018 = vcmp.gt.s32.totalorder %v1014, 0
        %vm1019 = vcmp.gt.s32.totalorder %v1015, 0
        %v1020 = vlog2.pop %v1016
        %v1021 = vmul.f32 %v1020, 0.6931472
        %v1022 = vlog2.pop %v1017
        %v1023 = vmul.f32 %v1022, 0.6931472
        %v1024 = vsel %vm1018, %v1021, -1e+30
        %v1025 = vsel %vm1019, %v1023, -1e+30
        %vm1026 = vcmask 64512
        %v1028 = vsel %vm1026, %v917, 0
        %v1031 = vsel %vm1026, %v918, 0
        %1033 = vmatprep.subr.bf16.mxu0 0
        %1034 = vmatpush1.bf16.xpose.msra.mxu0 0
        %1035 = vmatprep.subr.bf16.mxu0 0
        %1036 = vmatpush1.bf16.xpose.msra.mxu0 0
        %1037 = vmatprep.subr.bf16.mxu0 0
        %1038 = vmatpush1.bf16.xpose.msra.mxu0 0
        %1039 = vmatprep.subr.bf16.mxu0 0
        %1040 = vmatpush1.bf16.xpose.msra.mxu0 0
        %1041 = vmatprep.subr.bf16.mxu0 0
        %1042 = vmatpush1.bf16.xpose.msra.mxu0 0
        %1043 = vmatprep.subr.bf16.mxu0 0
        %1044 = vmatpush1.bf16.xpose.msra.mxu0 0
        %1045 = vmatprep.subr.bf16.mxu0 0
        %1046 = vmatpush1.bf16.xpose.msra.mxu0 0
        %1047 = vmatprep.subr.bf16.mxu0 0
        %1048 = vmatpush1.bf16.xpose.msra.mxu0 %v1031
        %1049 = vmatprep.subr.bf16.mxu0 0
        %1050 = vmatpush2.bf16.xpose.msra.mxu0 0
        %1051 = vmatprep.subr.bf16.mxu0 0
        %1052 = vmatpush2.bf16.xpose.msra.mxu0 0
        %1053 = vmatprep.subr.bf16.mxu0 0
        %1054 = vmatpush2.bf16.xpose.msra.mxu0 0
        %1055 = vmatprep.subr.bf16.mxu0 0
        %1056 = vmatpush2.bf16.xpose.msra.mxu0 0
        %1057 = vmatprep.subr.bf16.mxu0 0
        %1058 = vmatpush2.bf16.xpose.msra.mxu0 0
        %1059 = vmatprep.subr.bf16.mxu0 0
        %1060 = vmatpush2.bf16.xpose.msra.mxu0 0
        %1061 = vmatprep.subr.bf16.mxu0 0
        %1062 = vmatpush2.bf16.xpose.msra.mxu0 0
        %1063 = vmatprep.subr.bf16.mxu0 0
        %1064 = vmatpush2.bf16.xpose.msra.mxu0 0
        %1065 = vmatprep.mubr.bf16.mxu0 0
        %1066 = vmatmul.mubr.bf16.gmra.mxu0 %v1028
        %v1067 = vpop.f32.mrf.mxu0
        %v1068 = vadd.f32 %v1024, %v1067
        %v1069 = vpop.f32.mrf.mxu0
        %v1070 = vpop.f32.mrf.mxu0
        %v1071 = vadd.f32 %v1025, %v1070
        %v1072 = vpop.f32.mrf.mxu0
        %1073 = vdwg.mxu0
        %vm1074 = vcmask 130048
        %v1075 = vsel %vm1074, %v1068, -inf
        %1076 = vmax.xlane.f32.xlu0 %v1075
        %v1077 = vpop.xlane.xlu0 %1076
        %v1078 = vsel %vm1074, %v1071, -inf
        %1079 = vmax.xlane.f32.xlu0 %v1078
        %v1080 = vpop.xlane.xlu0 %1079
        %v1081 = vsub.f32 %v1068, %v1077
        %v1082 = vsub.f32 %v1071, %v1080
        %v1083 = vmul.f32 %v1081, 1.442695
        %v1084 = vpow.pop %v1083
        %v1085 = vmul.f32 %v1082, 1.442695
        %v1086 = vpow.pop %v1085
        %v1087 = vsel %vm1074, %v1084, 0.0
        %1088 = vadd.xlane.f32.xlu0 %v1087
        %v1089 = vpop.xlane.xlu0 %1088
        %v1090 = vsel %vm1074, %v1086, 0.0
        %1091 = vadd.xlane.f32.xlu0 %v1090
        %v1092 = vpop.xlane.xlu0 %1091
        %v1093 = vrcp.pop %v1089
        %v1094 = vrcp.pop %v1092
        %v1095 = vpack.c.bf16 %v1086, %v1084
        %v1097 = vsel %vm1074, %v1095, 0
        %1099 = vmatprep.subr.bf16.mxu0 0
        %1100 = vmatpush1.bf16.msra.mxu0 0
        %1101 = vmatprep.subr.bf16.mxu0 0
        %1102 = vmatpush1.bf16.msra.mxu0 0
        %1103 = vmatprep.subr.bf16.mxu0 0
        %1104 = vmatpush1.bf16.msra.mxu0 0
        %1105 = vmatprep.subr.bf16.mxu0 0
        %1106 = vmatpush1.bf16.msra.mxu0 0
        %1107 = vmatprep.subr.bf16.mxu0 0
        %1108 = vmatpush1.bf16.msra.mxu0 0
        %1109 = vmatprep.subr.bf16.mxu0 0
        %1110 = vmatpush1.bf16.msra.mxu0 0
        %1111 = vmatprep.subr.bf16.mxu0 0
        %1112 = vmatpush1.bf16.msra.mxu0 0
        %1113 = vmatprep.subr.bf16.mxu0 0
        %1114 = vmatpush1.bf16.msra.mxu0 %v919
        %1115 = vmatprep.subr.bf16.mxu0 0
        %1116 = vmatpush2.bf16.msra.mxu0 0
        %1117 = vmatprep.subr.bf16.mxu0 0
        %1118 = vmatpush2.bf16.msra.mxu0 0
        %1119 = vmatprep.subr.bf16.mxu0 0
        %1120 = vmatpush2.bf16.msra.mxu0 0
        %1121 = vmatprep.subr.bf16.mxu0 0
        %1122 = vmatpush2.bf16.msra.mxu0 0
        %1123 = vmatprep.subr.bf16.mxu0 0
        %1124 = vmatpush2.bf16.msra.mxu0 0
        %1125 = vmatprep.subr.bf16.mxu0 0
        %1126 = vmatpush2.bf16.msra.mxu0 0
        %1127 = vmatprep.subr.bf16.mxu0 0
        %1128 = vmatpush2.bf16.msra.mxu0 0
        %1129 = vmatprep.subr.bf16.mxu0 0
        %1130 = vmatpush2.bf16.msra.mxu0 0
        %1131 = vmatprep.mubr.bf16.mxu0 0
        %1132 = vmatmul.mubr.bf16.gmra.mxu0 %v1097
        %v1133 = vpop.f32.mrf.mxu0
        %v1134 = vadd.f32 0.0, %v1133
        %v1135 = vpop.f32.mrf.mxu0
        %v1136 = vpop.f32.mrf.mxu0
        %v1137 = vadd.f32 0.0, %v1136
        %v1138 = vpop.f32.mrf.mxu0
        %1139 = vdwg.mxu0
        %v1140 = vmul.f32 %v1134, %v1093
        %v1141 = vmul.f32 %v1137, %v1094
        %1143 = vrot.lane.b32.xlu0 %v917, 120
        %v1144 = vpop.permute.xlu0 %1143
        %1146 = vrot.lane.b32.xlu0 %v918, 120
        %v1147 = vpop.permute.xlu0 %1146
        %v1149 = vsel %vm1026, %v1144, 0
        %v1152 = vsel %vm1026, %v1147, 0
        %1154 = vmatprep.subr.bf16.mxu0 0
        %1155 = vmatpush1.bf16.xpose.msra.mxu0 0
        %1156 = vmatprep.subr.bf16.mxu0 0
        %1157 = vmatpush1.bf16.xpose.msra.mxu0 0
        %1158 = vmatprep.subr.bf16.mxu0 0
        %1159 = vmatpush1.bf16.xpose.msra.mxu0 0
        %1160 = vmatprep.subr.bf16.mxu0 0
        %1161 = vmatpush1.bf16.xpose.msra.mxu0 0
        %1162 = vmatprep.subr.bf16.mxu0 0
        %1163 = vmatpush1.bf16.xpose.msra.mxu0 0
        %1164 = vmatprep.subr.bf16.mxu0 0
        %1165 = vmatpush1.bf16.xpose.msra.mxu0 0
        %1166 = vmatprep.subr.bf16.mxu0 0
        %1167 = vmatpush1.bf16.xpose.msra.mxu0 0
        %1168 = vmatprep.subr.bf16.mxu0 0
        %1169 = vmatpush1.bf16.xpose.msra.mxu0 %v1152
        %1170 = vmatprep.subr.bf16.mxu0 0
        %1171 = vmatpush2.bf16.xpose.msra.mxu0 0
        %1172 = vmatprep.subr.bf16.mxu0 0
        %1173 = vmatpush2.bf16.xpose.msra.mxu0 0
        %1174 = vmatprep.subr.bf16.mxu0 0
        %1175 = vmatpush2.bf16.xpose.msra.mxu0 0
        %1176 = vmatprep.subr.bf16.mxu0 0
        %1177 = vmatpush2.bf16.xpose.msra.mxu0 0
        %1178 = vmatprep.subr.bf16.mxu0 0
        %1179 = vmatpush2.bf16.xpose.msra.mxu0 0
        %1180 = vmatprep.subr.bf16.mxu0 0
        %1181 = vmatpush2.bf16.xpose.msra.mxu0 0
        %1182 = vmatprep.subr.bf16.mxu0 0
        %1183 = vmatpush2.bf16.xpose.msra.mxu0 0
        %1184 = vmatprep.subr.bf16.mxu0 0
        %1185 = vmatpush2.bf16.xpose.msra.mxu0 0
        %1186 = vmatprep.mubr.bf16.mxu0 0
        %1187 = vmatmul.mubr.bf16.gmra.mxu0 %v1149
        %v1188 = vpop.f32.mrf.mxu0
        %v1189 = vadd.f32 %v1024, %v1188
        %v1190 = vpop.f32.mrf.mxu0
        %v1191 = vpop.f32.mrf.mxu0
        %v1192 = vadd.f32 %v1025, %v1191
        %v1193 = vpop.f32.mrf.mxu0
        %1194 = vdwg.mxu0
        %v1195 = vsel %vm1074, %v1189, -inf
        %1196 = vmax.xlane.f32.xlu0 %v1195
        %v1197 = vpop.xlane.xlu0 %1196
        %v1198 = vsel %vm1074, %v1192, -inf
        %1199 = vmax.xlane.f32.xlu0 %v1198
        %v1200 = vpop.xlane.xlu0 %1199
        %v1201 = vsub.f32 %v1189, %v1197
        %v1202 = vsub.f32 %v1192, %v1200
        %v1203 = vmul.f32 %v1201, 1.442695
        %v1204 = vpow.pop %v1203
        %v1205 = vmul.f32 %v1202, 1.442695
        %v1206 = vpow.pop %v1205
        %v1207 = vsel %vm1074, %v1204, 0.0
        %1208 = vadd.xlane.f32.xlu0 %v1207
        %v1209 = vpop.xlane.xlu0 %1208
        %v1210 = vsel %vm1074, %v1206, 0.0
        %1211 = vadd.xlane.f32.xlu0 %v1210
        %v1212 = vpop.xlane.xlu0 %1211
        %v1213 = vrcp.pop %v1209
        %v1214 = vrcp.pop %v1212
        %v1215 = vpack.c.bf16 %v1206, %v1204
        %1217 = vrot.lane.b32.xlu0 %v919, 120
        %v1218 = vpop.permute.xlu0 %1217
        %v1221 = vsel %vm1074, %v1215, 0
        %1223 = vmatprep.subr.bf16.mxu0 0
        %1224 = vmatpush1.bf16.msra.mxu0 0
        %1225 = vmatprep.subr.bf16.mxu0 0
        %1226 = vmatpush1.bf16.msra.mxu0 0
        %1227 = vmatprep.subr.bf16.mxu0 0
        %1228 = vmatpush1.bf16.msra.mxu0 0
        %1229 = vmatprep.subr.bf16.mxu0 0
        %1230 = vmatpush1.bf16.msra.mxu0 0
        %1231 = vmatprep.subr.bf16.mxu0 0
        %1232 = vmatpush1.bf16.msra.mxu0 0
        %1233 = vmatprep.subr.bf16.mxu0 0
        %1234 = vmatpush1.bf16.msra.mxu0 0
        %1235 = vmatprep.subr.bf16.mxu0 0
        %1236 = vmatpush1.bf16.msra.mxu0 0
        %1237 = vmatprep.subr.bf16.mxu0 0
        %1238 = vmatpush1.bf16.msra.mxu0 %v1218
        %1239 = vmatprep.subr.bf16.mxu0 0
        %1240 = vmatpush2.bf16.msra.mxu0 0
        %1241 = vmatprep.subr.bf16.mxu0 0
        %1242 = vmatpush2.bf16.msra.mxu0 0
        %1243 = vmatprep.subr.bf16.mxu0 0
        %1244 = vmatpush2.bf16.msra.mxu0 0
        %1245 = vmatprep.subr.bf16.mxu0 0
        %1246 = vmatpush2.bf16.msra.mxu0 0
        %1247 = vmatprep.subr.bf16.mxu0 0
        %1248 = vmatpush2.bf16.msra.mxu0 0
        %1249 = vmatprep.subr.bf16.mxu0 0
        %1250 = vmatpush2.bf16.msra.mxu0 0
        %1251 = vmatprep.subr.bf16.mxu0 0
        %1252 = vmatpush2.bf16.msra.mxu0 0
        %1253 = vmatprep.subr.bf16.mxu0 0
        %1254 = vmatpush2.bf16.msra.mxu0 0
        %1255 = vmatprep.mubr.bf16.mxu0 0
        %1256 = vmatmul.mubr.bf16.gmra.mxu0 %v1221
        %v1257 = vpop.f32.mrf.mxu0
        %v1258 = vadd.f32 0.0, %v1257
        %v1259 = vpop.f32.mrf.mxu0
        %v1260 = vpop.f32.mrf.mxu0
        %v1261 = vadd.f32 0.0, %v1260
        %v1262 = vpop.f32.mrf.mxu0
        %1263 = vdwg.mxu0
        %v1264 = vmul.f32 %v1258, %v1213
        %v1265 = vmul.f32 %v1261, %v1214
        %1266 = vrot.lane.b32.xlu0 %v917, 112
        %v1267 = vpop.permute.xlu0 %1266
        %1268 = vrot.lane.b32.xlu0 %v918, 112
        %v1269 = vpop.permute.xlu0 %1268
        %v1271 = vsel %vm1026, %v1267, 0
        %v1274 = vsel %vm1026, %v1269, 0
        %1276 = vmatprep.subr.bf16.mxu0 0
        %1277 = vmatpush1.bf16.xpose.msra.mxu0 0
        %1278 = vmatprep.subr.bf16.mxu0 0
        %1279 = vmatpush1.bf16.xpose.msra.mxu0 0
        %1280 = vmatprep.subr.bf16.mxu0 0
        %1281 = vmatpush1.bf16.xpose.msra.mxu0 0
        %1282 = vmatprep.subr.bf16.mxu0 0
        %1283 = vmatpush1.bf16.xpose.msra.mxu0 0
        %1284 = vmatprep.subr.bf16.mxu0 0
        %1285 = vmatpush1.bf16.xpose.msra.mxu0 0
        %1286 = vmatprep.subr.bf16.mxu0 0
        %1287 = vmatpush1.bf16.xpose.msra.mxu0 0
        %1288 = vmatprep.subr.bf16.mxu0 0
        %1289 = vmatpush1.bf16.xpose.msra.mxu0 0
        %1290 = vmatprep.subr.bf16.mxu0 0
        %1291 = vmatpush1.bf16.xpose.msra.mxu0 %v1274
        %1292 = vmatprep.subr.bf16.mxu0 0
        %1293 = vmatpush2.bf16.xpose.msra.mxu0 0
        %1294 = vmatprep.subr.bf16.mxu0 0
        %1295 = vmatpush2.bf16.xpose.msra.mxu0 0
        %1296 = vmatprep.subr.bf16.mxu0 0
        %1297 = vmatpush2.bf16.xpose.msra.mxu0 0
        %1298 = vmatprep.subr.bf16.mxu0 0
        %1299 = vmatpush2.bf16.xpose.msra.mxu0 0
        %1300 = vmatprep.subr.bf16.mxu0 0
        %1301 = vmatpush2.bf16.xpose.msra.mxu0 0
        %1302 = vmatprep.subr.bf16.mxu0 0
        %1303 = vmatpush2.bf16.xpose.msra.mxu0 0
        %1304 = vmatprep.subr.bf16.mxu0 0
        %1305 = vmatpush2.bf16.xpose.msra.mxu0 0
        %1306 = vmatprep.subr.bf16.mxu0 0
        %1307 = vmatpush2.bf16.xpose.msra.mxu0 0
        %1308 = vmatprep.mubr.bf16.mxu0 0
        %1309 = vmatmul.mubr.bf16.gmra.mxu0 %v1271
        %v1310 = vpop.f32.mrf.mxu0
        %v1311 = vadd.f32 %v1024, %v1310
        %v1312 = vpop.f32.mrf.mxu0
        %v1313 = vpop.f32.mrf.mxu0
        %v1314 = vadd.f32 %v1025, %v1313
        %v1315 = vpop.f32.mrf.mxu0
        %1316 = vdwg.mxu0
        %v1317 = vsel %vm1074, %v1311, -inf
        %1318 = vmax.xlane.f32.xlu0 %v1317
        %v1319 = vpop.xlane.xlu0 %1318
        %v1320 = vsel %vm1074, %v1314, -inf
        %1321 = vmax.xlane.f32.xlu0 %v1320
        %v1322 = vpop.xlane.xlu0 %1321
        %v1323 = vsub.f32 %v1311, %v1319
        %v1324 = vsub.f32 %v1314, %v1322
        %v1325 = vmul.f32 %v1323, 1.442695
        %v1326 = vpow.pop %v1325
        %v1327 = vmul.f32 %v1324, 1.442695
        %v1328 = vpow.pop %v1327
        %v1329 = vsel %vm1074, %v1326, 0.0
        %1330 = vadd.xlane.f32.xlu0 %v1329
        %v1331 = vpop.xlane.xlu0 %1330
        %v1332 = vsel %vm1074, %v1328, 0.0
        %1333 = vadd.xlane.f32.xlu0 %v1332
        %v1334 = vpop.xlane.xlu0 %1333
        %v1335 = vrcp.pop %v1331
        %v1336 = vrcp.pop %v1334
        %v1337 = vpack.c.bf16 %v1328, %v1326
        %1338 = vrot.lane.b32.xlu0 %v919, 112
        %v1339 = vpop.permute.xlu0 %1338
        %v1342 = vsel %vm1074, %v1337, 0
        %1344 = vmatprep.subr.bf16.mxu0 0
        %1345 = vmatpush1.bf16.msra.mxu0 0
        %1346 = vmatprep.subr.bf16.mxu0 0
        %1347 = vmatpush1.bf16.msra.mxu0 0
        %1348 = vmatprep.subr.bf16.mxu0 0
        %1349 = vmatpush1.bf16.msra.mxu0 0
        %1350 = vmatprep.subr.bf16.mxu0 0
        %1351 = vmatpush1.bf16.msra.mxu0 0
        %1352 = vmatprep.subr.bf16.mxu0 0
        %1353 = vmatpush1.bf16.msra.mxu0 0
        %1354 = vmatprep.subr.bf16.mxu0 0
        %1355 = vmatpush1.bf16.msra.mxu0 0
        %1356 = vmatprep.subr.bf16.mxu0 0
        %1357 = vmatpush1.bf16.msra.mxu0 0
        %1358 = vmatprep.subr.bf16.mxu0 0
        %1359 = vmatpush1.bf16.msra.mxu0 %v1339
        %1360 = vmatprep.subr.bf16.mxu0 0
        %1361 = vmatpush2.bf16.msra.mxu0 0
        %1362 = vmatprep.subr.bf16.mxu0 0
        %1363 = vmatpush2.bf16.msra.mxu0 0
        %1364 = vmatprep.subr.bf16.mxu0 0
        %1365 = vmatpush2.bf16.msra.mxu0 0
        %1366 = vmatprep.subr.bf16.mxu0 0
        %1367 = vmatpush2.bf16.msra.mxu0 0
        %1368 = vmatprep.subr.bf16.mxu0 0
        %1369 = vmatpush2.bf16.msra.mxu0 0
        %1370 = vmatprep.subr.bf16.mxu0 0
        %1371 = vmatpush2.bf16.msra.mxu0 0
        %1372 = vmatprep.subr.bf16.mxu0 0
        %1373 = vmatpush2.bf16.msra.mxu0 0
        %1374 = vmatprep.subr.bf16.mxu0 0
        %1375 = vmatpush2.bf16.msra.mxu0 0
        %1376 = vmatprep.mubr.bf16.mxu0 0
        %1377 = vmatmul.mubr.bf16.gmra.mxu0 %v1342
        %v1378 = vpop.f32.mrf.mxu0
        %v1379 = vadd.f32 0.0, %v1378
        %v1380 = vpop.f32.mrf.mxu0
        %v1381 = vpop.f32.mrf.mxu0
        %v1382 = vadd.f32 0.0, %v1381
        %v1383 = vpop.f32.mrf.mxu0
        %1384 = vdwg.mxu0
        %v1385 = vmul.f32 %v1379, %v1335
        %v1386 = vmul.f32 %v1382, %v1336
        %1387 = vrot.lane.b32.xlu0 %v917, 104
        %v1388 = vpop.permute.xlu0 %1387
        %1389 = vrot.lane.b32.xlu0 %v918, 104
        %v1390 = vpop.permute.xlu0 %1389
        %v1392 = vsel %vm1026, %v1388, 0
        %v1395 = vsel %vm1026, %v1390, 0
        %1397 = vmatprep.subr.bf16.mxu0 0
        %1398 = vmatpush1.bf16.xpose.msra.mxu0 0
        %1399 = vmatprep.subr.bf16.mxu0 0
        %1400 = vmatpush1.bf16.xpose.msra.mxu0 0
        %1401 = vmatprep.subr.bf16.mxu0 0
        %1402 = vmatpush1.bf16.xpose.msra.mxu0 0
        %1403 = vmatprep.subr.bf16.mxu0 0
        %1404 = vmatpush1.bf16.xpose.msra.mxu0 0
        %1405 = vmatprep.subr.bf16.mxu0 0
        %1406 = vmatpush1.bf16.xpose.msra.mxu0 0
        %1407 = vmatprep.subr.bf16.mxu0 0
        %1408 = vmatpush1.bf16.xpose.msra.mxu0 0
        %1409 = vmatprep.subr.bf16.mxu0 0
        %1410 = vmatpush1.bf16.xpose.msra.mxu0 0
        %1411 = vmatprep.subr.bf16.mxu0 0
        %1412 = vmatpush1.bf16.xpose.msra.mxu0 %v1395
        %1413 = vmatprep.subr.bf16.mxu0 0
        %1414 = vmatpush2.bf16.xpose.msra.mxu0 0
        %1415 = vmatprep.subr.bf16.mxu0 0
        %1416 = vmatpush2.bf16.xpose.msra.mxu0 0
        %1417 = vmatprep.subr.bf16.mxu0 0
        %1418 = vmatpush2.bf16.xpose.msra.mxu0 0
        %1419 = vmatprep.subr.bf16.mxu0 0
        %1420 = vmatpush2.bf16.xpose.msra.mxu0 0
        %1421 = vmatprep.subr.bf16.mxu0 0
        %1422 = vmatpush2.bf16.xpose.msra.mxu0 0
        %1423 = vmatprep.subr.bf16.mxu0 0
        %1424 = vmatpush2.bf16.xpose.msra.mxu0 0
        %1425 = vmatprep.subr.bf16.mxu0 0
        %1426 = vmatpush2.bf16.xpose.msra.mxu0 0
        %1427 = vmatprep.subr.bf16.mxu0 0
        %1428 = vmatpush2.bf16.xpose.msra.mxu0 0
        %1429 = vmatprep.mubr.bf16.mxu0 0
        %1430 = vmatmul.mubr.bf16.gmra.mxu0 %v1392
        %v1431 = vpop.f32.mrf.mxu0
        %v1432 = vadd.f32 %v1024, %v1431
        %v1433 = vpop.f32.mrf.mxu0
        %v1434 = vpop.f32.mrf.mxu0
        %v1435 = vadd.f32 %v1025, %v1434
        %v1436 = vpop.f32.mrf.mxu0
        %1437 = vdwg.mxu0
        %v1438 = vsel %vm1074, %v1432, -inf
        %1439 = vmax.xlane.f32.xlu0 %v1438
        %v1440 = vpop.xlane.xlu0 %1439
        %v1441 = vsel %vm1074, %v1435, -inf
        %1442 = vmax.xlane.f32.xlu0 %v1441
        %v1443 = vpop.xlane.xlu0 %1442
        %v1444 = vsub.f32 %v1432, %v1440
        %v1445 = vsub.f32 %v1435, %v1443
        %v1446 = vmul.f32 %v1444, 1.442695
        %v1447 = vpow.pop %v1446
        %v1448 = vmul.f32 %v1445, 1.442695
        %v1449 = vpow.pop %v1448
        %v1450 = vsel %vm1074, %v1447, 0.0
        %1451 = vadd.xlane.f32.xlu0 %v1450
        %v1452 = vpop.xlane.xlu0 %1451
        %v1453 = vsel %vm1074, %v1449, 0.0
        %1454 = vadd.xlane.f32.xlu0 %v1453
        %v1455 = vpop.xlane.xlu0 %1454
        %v1456 = vrcp.pop %v1452
        %v1457 = vrcp.pop %v1455
        %v1458 = vpack.c.bf16 %v1449, %v1447
        %1459 = vrot.lane.b32.xlu0 %v919, 104
        %v1460 = vpop.permute.xlu0 %1459
        %v1463 = vsel %vm1074, %v1458, 0
        %1465 = vmatprep.subr.bf16.mxu0 0
        %1466 = vmatpush1.bf16.msra.mxu0 0
        %1467 = vmatprep.subr.bf16.mxu0 0
        %1468 = vmatpush1.bf16.msra.mxu0 0
        %1469 = vmatprep.subr.bf16.mxu0 0
        %1470 = vmatpush1.bf16.msra.mxu0 0
        %1471 = vmatprep.subr.bf16.mxu0 0
        %1472 = vmatpush1.bf16.msra.mxu0 0
        %1473 = vmatprep.subr.bf16.mxu0 0
        %1474 = vmatpush1.bf16.msra.mxu0 0
        %1475 = vmatprep.subr.bf16.mxu0 0
        %1476 = vmatpush1.bf16.msra.mxu0 0
        %1477 = vmatprep.subr.bf16.mxu0 0
        %1478 = vmatpush1.bf16.msra.mxu0 0
        %1479 = vmatprep.subr.bf16.mxu0 0
        %1480 = vmatpush1.bf16.msra.mxu0 %v1460
        %1481 = vmatprep.subr.bf16.mxu0 0
        %1482 = vmatpush2.bf16.msra.mxu0 0
        %1483 = vmatprep.subr.bf16.mxu0 0
        %1484 = vmatpush2.bf16.msra.mxu0 0
        %1485 = vmatprep.subr.bf16.mxu0 0
        %1486 = vmatpush2.bf16.msra.mxu0 0
        %1487 = vmatprep.subr.bf16.mxu0 0
        %1488 = vmatpush2.bf16.msra.mxu0 0
        %1489 = vmatprep.subr.bf16.mxu0 0
        %1490 = vmatpush2.bf16.msra.mxu0 0
        %1491 = vmatprep.subr.bf16.mxu0 0
        %1492 = vmatpush2.bf16.msra.mxu0 0
        %1493 = vmatprep.subr.bf16.mxu0 0
        %1494 = vmatpush2.bf16.msra.mxu0 0
        %1495 = vmatprep.subr.bf16.mxu0 0
        %1496 = vmatpush2.bf16.msra.mxu0 0
        %1497 = vmatprep.mubr.bf16.mxu0 0
        %1498 = vmatmul.mubr.bf16.gmra.mxu0 %v1463
        %v1499 = vpop.f32.mrf.mxu0
        %v1500 = vadd.f32 0.0, %v1499
        %v1501 = vpop.f32.mrf.mxu0
        %v1502 = vpop.f32.mrf.mxu0
        %v1503 = vadd.f32 0.0, %v1502
        %v1504 = vpop.f32.mrf.mxu0
        %1505 = vdwg.mxu0
        %v1506 = vmul.f32 %v1500, %v1456
        %v1507 = vmul.f32 %v1503, %v1457
        %1510 = vrot.lane.b32.xlu0 %v1264, 8
        %v1511 = vpop.permute.xlu0 %1510
        %1512 = vrot.lane.b32.xlu0 %v1265, 8
        %v1513 = vpop.permute.xlu0 %1512
        %1518 = vrot.lane.b32.xlu0 %v1385, 16
        %v1519 = vpop.permute.xlu0 %1518
        %1520 = vrot.lane.b32.xlu0 %v1386, 16
        %v1521 = vpop.permute.xlu0 %1520
        %1526 = vrot.lane.b32.xlu0 %v1506, 24
        %v1527 = vpop.permute.xlu0 %1526
        %1528 = vrot.lane.b32.xlu0 %v1507, 24
        %v1529 = vpop.permute.xlu0 %1528
        %v1532 = vsel %vm1026, %v1140, %v1511
        %v1533 = vsel %vm1026, %v1141, %v1513
        %v1534 = vsel %vm1074, %v1532, %v1519
        %v1535 = vsel %vm1074, %v1533, %v1521
        %vm1536 = vcmask 195584
        %v1537 = vsel %vm1536, %v1534, %v1527
        %v1538 = vsel %vm1536, %v1535, %v1529
        %v1539 = vpack.c.bf16 %v1538, %v1537
        %v1540 = vld [vmem:[#allocation7] sm:$0xf]
        %v1541 = vld [vmem:[#allocation7 + $0x4] sm:$0xf]
        %v1542 = vld [vmem:[#allocation7 + $0x8] sm:$0xf]
        %v1543 = vld [vmem:[#allocation7 + $0xc] sm:$0xf]
        %v1544 = vld [vmem:[%s10] sm:$0x1]
        %v1546 = vlaneseq
        %v1547 = vshrl.u32 %v1546, 7
        %v1548 = vsub.s32 0, %v1547
        %v1549 = vrot.slane %v1544, %v1548
        %v1555 = vunpack.c.l.b16 %v1540
        %v1556 = vunpack.c.l.b16 %v1541
        %v1557 = vunpack.c.l.b16 %v1542
        %v1558 = vunpack.c.l.b16 %v1543
        %v1559 = vpack.c.b16 %v1556, %v1555
        %v1560 = vpack.c.b16 %v1558, %v1557
        %v1564 = vsel %vm739, %v1539, 0
        %1566 = vmatprep.subr.bf16.mxu0 0
        %1567 = vmatpush1.bf16.msra.mxu0 0
        %1568 = vmatprep.subr.bf16.mxu0 0
        %1569 = vmatpush1.bf16.msra.mxu0 0
        %1570 = vmatprep.subr.bf16.mxu0 0
        %1571 = vmatpush1.bf16.msra.mxu0 0
        %1572 = vmatprep.subr.bf16.mxu0 0
        %1573 = vmatpush1.bf16.msra.mxu0 0
        %1574 = vmatprep.subr.bf16.mxu0 0
        %1575 = vmatpush1.bf16.msra.mxu0 0
        %1576 = vmatprep.subr.bf16.mxu0 0
        %1577 = vmatpush1.bf16.msra.mxu0 0
        %1578 = vmatprep.subr.bf16.mxu0 0
        %1579 = vmatpush1.bf16.msra.mxu0 %v1560
        %1580 = vmatprep.subr.bf16.mxu0 0
        %1581 = vmatpush1.bf16.msra.mxu0 %v1559
        %1582 = vmatprep.subr.bf16.mxu0 0
        %1583 = vmatpush2.bf16.msra.mxu0 0
        %1584 = vmatprep.subr.bf16.mxu0 0
        %1585 = vmatpush2.bf16.msra.mxu0 0
        %1586 = vmatprep.subr.bf16.mxu0 0
        %1587 = vmatpush2.bf16.msra.mxu0 0
        %1588 = vmatprep.subr.bf16.mxu0 0
        %1589 = vmatpush2.bf16.msra.mxu0 0
        %1590 = vmatprep.subr.bf16.mxu0 0
        %1591 = vmatpush2.bf16.msra.mxu0 0
        %1592 = vmatprep.subr.bf16.mxu0 0
        %1593 = vmatpush2.bf16.msra.mxu0 0
        %1594 = vmatprep.subr.bf16.mxu0 0
        %1595 = vmatpush2.bf16.msra.mxu0 0
        %1596 = vmatprep.subr.bf16.mxu0 0
        %1597 = vmatpush2.bf16.msra.mxu0 0
        %1598 = vmatprep.mubr.bf16.mxu0 0
        %1599 = vmatmul.mubr.bf16.gmra.mxu0 %v1564
        %v1600 = vpop.f32.mrf.mxu0
        %v1601 = vadd.f32 %v1549, %v1600
        %v1602 = vpop.f32.mrf.mxu0
        %v1603 = vpop.f32.mrf.mxu0
        %v1604 = vadd.f32 %v1549, %v1603
        %v1605 = vpop.f32.mrf.mxu0
        %1606 = vdwg.mxu0
        %v1607 = vadd.f32 %v1601, %v708
        %v1608 = vadd.f32 %v1604, %v709
        %v1609 = vld [vmem:[%s11] sm:$0x1]
        %v1610 = vld [vmem:[%s12] sm:$0x1]
        %v1611 = vsel %vm739, %v1607, 0.0
        %1612 = vadd.xlane.f32.xlu0 %v1611
        %v1613 = vpop.xlane.xlu0 %1612
        %v1614 = vsel %vm739, %v1608, 0.0
        %1615 = vadd.xlane.f32.xlu0 %v1614
        %v1616 = vpop.xlane.xlu0 %1615
        %v1617 = vrcp.pop 32.0
        %v1618 = vmul.f32 %v1613, %v1617
        %v1619 = vmul.f32 %v1616, %v1617
        %v1620 = vsub.f32 %v1607, %v1618
        %v1621 = vsub.f32 %v1608, %v1619
        %v1622 = vmul.f32 %v1620, %v1620
        %v1623 = vmul.f32 %v1621, %v1621
        %v1624 = vsel %vm739, %v1622, 0.0
        %1625 = vadd.xlane.f32.xlu0 %v1624
        %v1626 = vpop.xlane.xlu0 %1625
        %v1627 = vsel %vm739, %v1623, 0.0
        %1628 = vadd.xlane.f32.xlu0 %v1627
        %v1629 = vpop.xlane.xlu0 %1628
        %v1630 = vmul.f32 %v1626, %v1617
        %v1631 = vmul.f32 %v1629, %v1617
        %v1632 = vadd.f32 %v1630, 1e-05
        %v1633 = vadd.f32 %v1631, 1e-05
        %v1634 = vrsqrt.pop %v1632
        %v1635 = vrsqrt.pop %v1633
        %v1636 = vmul.f32 %v1620, %v1634
        %v1637 = vmul.f32 %v1621, %v1635
        %v1639 = vlaneseq
        %v1640 = vshrl.u32 %v1639, 7
        %v1641 = vsub.s32 0, %v1640
        %v1642 = vrot.slane %v1609, %v1641
        %v1644 = vmul.f32 %v1636, %v1642
        %v1645 = vmul.f32 %v1637, %v1642
        %v1647 = vlaneseq
        %v1648 = vshrl.u32 %v1647, 7
        %v1649 = vsub.s32 0, %v1648
        %v1650 = vrot.slane %v1610, %v1649
        %v1652 = vadd.f32 %v1644, %v1650
        %v1653 = vadd.f32 %v1645, %v1650
        %v1654 = vpack.c.bf16 %v1653, %v1652
        %v1655 = vld [vmem:[#allocation8] sm:$0xf]
        %v1656 = vld [vmem:[#allocation8 + $0x4] sm:$0xf]
        %v1657 = vld [vmem:[#allocation8 + $0x8] sm:$0xf]
        %v1658 = vld [vmem:[#allocation8 + $0xc] sm:$0xf]
        %v1659 = vld [vmem:[%s14] sm:$0x1]
        %v1661 = vlaneseq
        %v1662 = vshrl.u32 %v1661, 7
        %v1663 = vsub.s32 0, %v1662
        %v1664 = vrot.slane %v1659, %v1663
        %v1670 = vunpack.c.l.b16 %v1655
        %v1671 = vunpack.c.l.b16 %v1656
        %v1672 = vunpack.c.l.b16 %v1657
        %v1673 = vunpack.c.l.b16 %v1658
        %v1674 = vpack.c.b16 %v1671, %v1670
        %v1675 = vpack.c.b16 %v1673, %v1672
        %v1679 = vsel %vm739, %v1654, 0
        %1681 = vmatprep.subr.bf16.mxu0 0
        %1682 = vmatpush1.bf16.msra.mxu0 0
        %1683 = vmatprep.subr.bf16.mxu0 0
        %1684 = vmatpush1.bf16.msra.mxu0 0
        %1685 = vmatprep.subr.bf16.mxu0 0
        %1686 = vmatpush1.bf16.msra.mxu0 0
        %1687 = vmatprep.subr.bf16.mxu0 0
        %1688 = vmatpush1.bf16.msra.mxu0 0
        %1689 = vmatprep.subr.bf16.mxu0 0
        %1690 = vmatpush1.bf16.msra.mxu0 0
        %1691 = vmatprep.subr.bf16.mxu0 0
        %1692 = vmatpush1.bf16.msra.mxu0 0
        %1693 = vmatprep.subr.bf16.mxu0 0
        %1694 = vmatpush1.bf16.msra.mxu0 %v1675
        %1695 = vmatprep.subr.bf16.mxu0 0
        %1696 = vmatpush1.bf16.msra.mxu0 %v1674
        %1697 = vmatprep.subr.bf16.mxu0 0
        %1698 = vmatpush2.bf16.msra.mxu0 0
        %1699 = vmatprep.subr.bf16.mxu0 0
        %1700 = vmatpush2.bf16.msra.mxu0 0
        %1701 = vmatprep.subr.bf16.mxu0 0
        %1702 = vmatpush2.bf16.msra.mxu0 0
        %1703 = vmatprep.subr.bf16.mxu0 0
        %1704 = vmatpush2.bf16.msra.mxu0 0
        %1705 = vmatprep.subr.bf16.mxu0 0
        %1706 = vmatpush2.bf16.msra.mxu0 0
        %1707 = vmatprep.subr.bf16.mxu0 0
        %1708 = vmatpush2.bf16.msra.mxu0 0
        %1709 = vmatprep.subr.bf16.mxu0 0
        %1710 = vmatpush2.bf16.msra.mxu0 0
        %1711 = vmatprep.subr.bf16.mxu0 0
        %1712 = vmatpush2.bf16.msra.mxu0 0
        %1713 = vmatprep.mubr.bf16.mxu0 0
        %1714 = vmatmul.mubr.bf16.gmra.mxu0 %v1679
        %v1715 = vpop.f32.mrf.mxu0
        %v1716 = vadd.f32 %v1664, %v1715
        %v1717 = vpop.f32.mrf.mxu0
        %v1718 = vpop.f32.mrf.mxu0
        %v1719 = vadd.f32 %v1664, %v1718
        %v1720 = vpop.f32.mrf.mxu0
        %1721 = vdwg.mxu0
        %v1722 = vmax.f32 %v1716, 0.0
        %v1723 = vmax.f32 %v1719, 0.0
        %v1724 = vpack.c.bf16 %v1723, %v1722
        %v1725 = vld [vmem:[%s15] sm:$0xf]
        %v1726 = vld [vmem:[%s15 + $0x4] sm:$0xf]
        %v1727 = vld [vmem:[%s15 + $0x8] sm:$0xf]
        %v1728 = vld [vmem:[%s15 + $0xc] sm:$0xf]
        %v1729 = vld [vmem:[%s15 + $0x10] sm:$0xf]
        %v1730 = vld [vmem:[%s15 + $0x14] sm:$0xf]
        %v1731 = vld [vmem:[%s15 + $0x18] sm:$0xf]
        %v1732 = vld [vmem:[%s15 + $0x1c] sm:$0xf]
        %v1733 = vld [vmem:[%s16] sm:$0x1]
        %v1735 = vlaneseq
        %v1736 = vshrl.u32 %v1735, 7
        %v1737 = vsub.s32 0, %v1736
        %v1738 = vrot.slane %v1733, %v1737
        %v1748 = vunpack.c.l.b16 %v1725
        %v1749 = vunpack.c.l.b16 %v1726
        %v1750 = vunpack.c.l.b16 %v1727
        %v1751 = vunpack.c.l.b16 %v1728
        %v1752 = vunpack.c.l.b16 %v1729
        %v1753 = vunpack.c.l.b16 %v1730
        %v1754 = vunpack.c.l.b16 %v1731
        %v1755 = vunpack.c.l.b16 %v1732
        %v1756 = vpack.c.b16 %v1749, %v1748
        %v1757 = vpack.c.b16 %v1751, %v1750
        %v1758 = vpack.c.b16 %v1753, %v1752
        %v1759 = vpack.c.b16 %v1755, %v1754
        %vm1764 = vcmask 523264
        %v1766 = vsel %vm1764, %v1724, 0
        %1768 = vmatprep.subr.bf16.mxu0 0
        %1769 = vmatpush1.bf16.msra.mxu0 0
        %1770 = vmatprep.subr.bf16.mxu0 0
        %1771 = vmatpush1.bf16.msra.mxu0 0
        %1772 = vmatprep.subr.bf16.mxu0 0
        %1773 = vmatpush1.bf16.msra.mxu0 0
        %1774 = vmatprep.subr.bf16.mxu0 0
        %1775 = vmatpush1.bf16.msra.mxu0 0
        %1776 = vmatprep.subr.bf16.mxu0 0
        %1777 = vmatpush1.bf16.msra.mxu0 %v1759
        %1778 = vmatprep.subr.bf16.mxu0 0
        %1779 = vmatpush1.bf16.msra.mxu0 %v1758
        %1780 = vmatprep.subr.bf16.mxu0 0
        %1781 = vmatpush1.bf16.msra.mxu0 %v1757
        %1782 = vmatprep.subr.bf16.mxu0 0
        %1783 = vmatpush1.bf16.msra.mxu0 %v1756
        %1784 = vmatprep.subr.bf16.mxu0 0
        %1785 = vmatpush2.bf16.msra.mxu0 0
        %1786 = vmatprep.subr.bf16.mxu0 0
        %1787 = vmatpush2.bf16.msra.mxu0 0
        %1788 = vmatprep.subr.bf16.mxu0 0
        %1789 = vmatpush2.bf16.msra.mxu0 0
        %1790 = vmatprep.subr.bf16.mxu0 0
        %1791 = vmatpush2.bf16.msra.mxu0 0
        %1792 = vmatprep.subr.bf16.mxu0 0
        %1793 = vmatpush2.bf16.msra.mxu0 0
        %1794 = vmatprep.subr.bf16.mxu0 0
        %1795 = vmatpush2.bf16.msra.mxu0 0
        %1796 = vmatprep.subr.bf16.mxu0 0
        %1797 = vmatpush2.bf16.msra.mxu0 0
        %1798 = vmatprep.subr.bf16.mxu0 0
        %1799 = vmatpush2.bf16.msra.mxu0 0
        %1800 = vmatprep.mubr.bf16.mxu0 0
        %1801 = vmatmul.mubr.bf16.gmra.mxu0 %v1766
        %v1802 = vpop.f32.mrf.mxu0
        %v1803 = vadd.f32 %v1738, %v1802
        %v1804 = vpop.f32.mrf.mxu0
        %v1805 = vpop.f32.mrf.mxu0
        %v1806 = vadd.f32 %v1738, %v1805
        %v1807 = vpop.f32.mrf.mxu0
        %1808 = vdwg.mxu0
        %v1809 = vadd.f32 %v1652, %v1803
        %v1810 = vadd.f32 %v1653, %v1806
        %v1811 = vld [vmem:[%s17] sm:$0x1]
        %v1812 = vld [vmem:[%s18] sm:$0x1]
        %v1813 = vsel %vm739, %v1809, 0.0
        %1814 = vadd.xlane.f32.xlu0 %v1813
        %v1815 = vpop.xlane.xlu0 %1814
        %v1816 = vsel %vm739, %v1810, 0.0
        %1817 = vadd.xlane.f32.xlu0 %v1816
        %v1818 = vpop.xlane.xlu0 %1817
        %v1819 = vmul.f32 %v1815, %v1617
        %v1820 = vmul.f32 %v1818, %v1617
        %v1821 = vsub.f32 %v1809, %v1819
        %v1822 = vsub.f32 %v1810, %v1820
        %v1823 = vmul.f32 %v1821, %v1821
        %v1824 = vmul.f32 %v1822, %v1822
        %v1825 = vsel %vm739, %v1823, 0.0
        %1826 = vadd.xlane.f32.xlu0 %v1825
        %v1827 = vpop.xlane.xlu0 %1826
        %v1828 = vsel %vm739, %v1824, 0.0
        %1829 = vadd.xlane.f32.xlu0 %v1828
        %v1830 = vpop.xlane.xlu0 %1829
        %v1831 = vmul.f32 %v1827, %v1617
        %v1832 = vmul.f32 %v1830, %v1617
        %v1833 = vadd.f32 %v1831, 1e-05
        %v1834 = vadd.f32 %v1832, 1e-05
        %v1835 = vrsqrt.pop %v1833
        %v1836 = vrsqrt.pop %v1834
        %v1837 = vmul.f32 %v1821, %v1835
        %v1838 = vmul.f32 %v1822, %v1836
        %v1840 = vlaneseq
        %v1841 = vshrl.u32 %v1840, 7
        %v1842 = vsub.s32 0, %v1841
        %v1843 = vrot.slane %v1811, %v1842
        %v1845 = vmul.f32 %v1837, %v1843
        %v1846 = vmul.f32 %v1838, %v1843
        %v1848 = vlaneseq
        %v1849 = vshrl.u32 %v1848, 7
        %v1850 = vsub.s32 0, %v1849
        %v1851 = vrot.slane %v1812, %v1850
        %v1853 = vadd.f32 %v1845, %v1851
        %v1854 = vadd.f32 %v1846, %v1851
        %1855 = vst.msk [vmem:[%s687] sm:$0xff] %vm739, %v1853
        %1856 = vst.msk [vmem:[%s687 + $0x8] sm:$0xff] %vm739, %v1854
        %s1857 = sand.u32 %s458, 1
        %s1858 = scalar_lea.sflag [#allocation4], %s1857
        %s1859 = sand.u32 %s458, 1
        %s1860 = smul.addr %s1859, 16
        %s1861 = scalar_lea.vmem [#allocation10], %s1860
        // Predicated region
        $region113: #{tpu_custom_call.1} parent=95 // pred_check
          %p1862 = pneg %p468
        $region114: #{tpu_custom_call.1} parent=95 // pred_check_branch
          %1864 = sbr.rel (%p1862) target = $region116
        $region115: #{tpu_custom_call.1} parent=95 // pred_region
          %s1865 = smul.u32 2, %s36
          %s1867 = ssub.s32 256, 256
          %1868 = vsyncadd %s1858, %s1867
          %s1869 = smul.addr %s1865, 128
          %s1870 = scalar_lea.hbm %s19, %s1869
          %s1871 = sshll.u32 %s1861, 4
          %s1872 = int_to_ptr.vmem [resolvable:$true] %s1871
          %1877 = dma.vmem_to_hbm [thread:$0]  %s1872, 256, %s1870, %s1858, 128, 128, 8
        $region116: #{tpu_custom_call.1} parent=95 // pred_fallthru
          _
      $region96: #{tpu_custom_call.1} parent=5 // pred_fallthru
        _
      %p1878 = scmp.le.s32.totalorder 2, %s31
      // Predicated region
      $region117: #{tpu_custom_call.1} parent=5 // pred_check
        %p1879 = pneg %p1878
      $region118: #{tpu_custom_call.1} parent=5 // pred_check_branch
        %1881 = sbr.rel (%p1879) target = $region120
      $region119: #{tpu_custom_call.1} parent=5 // pred_region
        %s1882 = ssub.s32 %s31, 2
        // Predicated region
        $region121: #{tpu_custom_call.1} parent=119 // pred_check
          %p1883 = pneg %p474
        $region122: #{tpu_custom_call.1} parent=119 // pred_check_branch
          %1885 = sbr.rel (%p1883) target = $region124
        $region123: #{tpu_custom_call.1} parent=119 // pred_region
          %s1886 = sand.u32 %s459, 1
          %s1887 = scalar_lea.sflag [#allocation4], %s1886
          %s1888 = sand.u32 %s459, 1
          %s1889 = smul.addr %s1888, 16
          %s1890 = scalar_lea.vmem [#allocation10], %s1889
          %1891 = dma.done %s1887, 256
        $region124: #{tpu_custom_call.1} parent=119 // pred_fallthru
          _
      $region120: #{tpu_custom_call.1} parent=5 // pred_fallthru
        _
    $region6: #{tpu_custom_call.1} parent=1 // loop_footer
      %s35 = sadd.s32 1, %s31
    $region7: #{tpu_custom_call.1} parent=1 // loop_footer_branch
      %30 = sbr.rel target = $region3
    $region8: #{tpu_custom_call.1} parent=1 // loop_exit
      _
    %1892 = vsyncpa [#allocation3], 1
    %s1893 = scalar_lea.sflag [#allocation3], 1
    %1894 = vsyncpa %s1893, 1
    %1895 = vsyncpa [#allocation6], 1
    %1896 = vsyncpa [#allocation9], 1
    %1897 = vsyncpa [#allocation4], 1
    %s1898 = scalar_lea.sflag [#allocation4], 1
    %1899 = vsyncpa %s1898, 1

</llo_original>
